<compile_context>
chip_gen: v7x
topology: tpu7x:2x2x1
jax: 0.10.0
libtpu: 0.0.40
codegen_flags: <defaults>
</compile_context>

<pallas_src>
import jax
import jax.numpy as jnp
import numpy as np
from jax.experimental import pallas as pl
from jax.experimental.pallas import tpu as pltpu

_LANE = 128


def _round_up(n: int, m: int) -> int:
    return ((n + m - 1) // m) * m


def gcn_module_kernel(x_ref, adj_ref, w_ref, o_ref):
    """Fused forward of the whole GCN_module for one group of relations.

    x_ref:   (P, P)       zero-padded shared first-layer features (valid [:S, :Fin])
    adj_ref: (Rg, P, P)   this group's per-relation adjacency (zero-padded)
    w_ref:   (L, P, P)    stacked, zero-padded layer weights
    o_ref:   (Rg, P, P)   final activations (valid data in [:, :S, :Fout])
    """
    Rg, P, _ = adj_ref.shape
    L = w_ref.shape[0]

    adj = adj_ref[...]                                   # (Rg, P, P)
    adj_flat = adj.reshape(Rg * P, P)                    # all relations' rows stacked

    # ---- layer-invariant work, computed ONCE per group ----------------------
    # torch: denom = adj.sum(dim=2, keepdim=True)  -> per-relation column sums.
    denom = jnp.sum(adj, axis=1)                         # (Rg, P)
    denom_safe = jnp.where(denom == 0.0, jnp.ones_like(denom), denom)
    inv = pl.reciprocal(denom_safe, approx=False)        # exact 1/x
    # Hoisted broadcast: out[r, i, f] = intm[r, i, f] * inv[r, f]  (Fout == S)
    inv3 = jnp.broadcast_to(inv[:, None, :], (Rg, P, P))

    # ---- layer 0: shared input -> hidden computed once; adj matmuls batched --
    hidden0 = jnp.dot(x_ref[...], w_ref[0],
                      preferred_element_type=jnp.float32)            # (P, P)
    intm = jnp.dot(adj_flat, hidden0,
                   preferred_element_type=jnp.float32)               # (Rg*P, P)
    h = jnp.maximum(intm.reshape(Rg, P, P) * inv3, 0.0)              # ReLU

    # ---- layers 1..L-1: fully fused; feature matmul batched over relations ---
    for l in range(1, L):
        hidden = jnp.dot(h.reshape(Rg * P, P), w_ref[l],
                         preferred_element_type=jnp.float32).reshape(Rg, P, P)
        intm = jnp.einsum('rij,rjf->rif', adj, hidden,
                          preferred_element_type=jnp.float32)        # batched MXU
        h = jnp.maximum(intm * inv3, 0.0)

    # Single contiguous, lane-dense writeback.
    o_ref[...] = h


@jax.jit
def gcn_module_pallas(x, adj, weights):
    """GCN_module forward (all layers) in one pallas_call.

    x:       (1, S, Fin)   shared input features
    adj:     (1, R, S, S)  relational adjacency
    weights: list of L arrays (Fin, Fout), all (hidden_dim, hidden_dim)
    returns  (1, R, S, Fout)
    """
    B, R, S, _ = adj.shape
    assert B == 1, "torch's 4-D adj broadcast in this module is only defined for batch size 1"

    w = jnp.stack([jnp.asarray(wi, jnp.float32) for wi in weights], axis=0)  # (L, Fin, Fout)
    L, Fin, Fout = w.shape
    assert Fout == S, "module's division broadcast requires out_features == seq_len"
    assert x.shape == (1, S, Fin), "first-layer in_features must match x feature dim"

    # Lane-dense padding target (S, Fin, Fout all padded to the same P).
    P = _round_up(max(S, Fin, Fout), _LANE)

    x_p = jnp.zeros((P, P), jnp.float32).at[:S, :Fin].set(
        jnp.asarray(x, jnp.float32).reshape(S, Fin))
    adj_p = jnp.zeros((R, P, P), jnp.float32).at[:, :S, :S].set(
        jnp.asarray(adj, jnp.float32).reshape(R, S, S))
    w_p = jnp.zeros((L, P, P), jnp.float32).at[:, :Fin, :Fout].set(w)

    # Relation groups: 2 when possible so v7x's two TensorCores each take half
    # the relations (parallel grid axis); a cheap 2-step loop on v5e/v6e.
    G = 2 if (R % 2 == 0 and R >= 2) else 1
    Rg = R // G

    out_p = pl.pallas_call(
        gcn_module_kernel,
        out_shape=jax.ShapeDtypeStruct((R, P, P), jnp.float32),
        grid=(G,),
        in_specs=[
            pl.BlockSpec((P, P), lambda g: (0, 0)),        # shared x (fetched once)
            pl.BlockSpec((Rg, P, P), lambda g: (g, 0, 0)),  # this group's relations
            pl.BlockSpec((L, P, P), lambda g: (0, 0, 0)),   # shared weights
        ],
        out_specs=pl.BlockSpec((Rg, P, P), lambda g: (g, 0, 0)),
        compiler_params=pltpu.CompilerParams(
            dimension_semantics=("parallel",),
        ),
    )(x_p, adj_p, w_p)

    # Slice the padding back off.
    return out_p[:, :S, :Fout].reshape(1, R, S, Fout)


def gcn_module_ref(x, adj, weights):
    """Pure-JAX reference matching the PyTorch forward exactly (B == 1)."""
    for w in weights:
        hidden = jnp.matmul(x, w)
        if hidden.ndim == 3:
            hidden = hidden[:, None]                      # torch batch broadcast
        denom = jnp.sum(adj, axis=2, keepdims=True)       # (1, R, 1, S)
        intm = jnp.matmul(adj, hidden)                    # (1, R, S, Fout)
        denom_safe = jnp.where(denom == 0.0, jnp.ones_like(denom), denom)
        x = jax.nn.relu(intm / denom_safe)
    return x


if __name__ == "__main__":
    # Small shapes consistent with the module's own broadcasting rules:
    # batch B = 1, relations R = 4, seq S = 16, in_features = out_features = 16.
    B, R, S = 1, 4, 16
    in_features = out_features = S
    num_layer = 2

    key = jax.random.PRNGKey(0)
    kx, kadj, kw = jax.random.split(key, 3)

    x = jax.random.normal(kx, (B, S, in_features), dtype=jnp.float32)
    # binary syntactic adjacency (some zero columns possible -> exercises denom==0 path)
    adj = jax.random.bernoulli(kadj, 0.4, (B, R, S, S)).astype(jnp.float32)

    # Deterministic weight init (torch.FloatTensor(in, out) is uninitialized;
    # we use a fixed-seed normal instead).
    wkeys = jax.random.split(kw, num_layer)
    weights = [
        0.1 * jax.random.normal(wkeys[i], (in_features, out_features), dtype=jnp.float32)
        for i in range(num_layer)
    ]

    out = gcn_module_pallas(x, adj, weights)
    out = jax.block_until_ready(out)

    ref = gcn_module_ref(x, adj, weights)
    np.testing.assert_allclose(np.asarray(out), np.asarray(ref), rtol=1e-4, atol=1e-4)

    print("KERNEL_OK")
</pallas_src>

<mosaic_0001>
module attributes {stable_mosaic.version = 11 : i64} {
  func.func @gcn_module_kernel(%arg0: i32, %arg1: memref<128x128xf32, #tpu.memory_space<vmem>>, %arg2: memref<2x128x128xf32, #tpu.memory_space<vmem>>, %arg3: memref<2x128x128xf32, #tpu.memory_space<vmem>>, %arg4: memref<2x128x128xf32, #tpu.memory_space<vmem>>) attributes {dimension_semantics = [#tpu.dimension_semantics<parallel>], iteration_bounds = array<i64: 2>, scalar_prefetch = 0 : i64, scratch_operands = 0 : i64, tpu.core_type = #tpu.core_type<tc>, window_params = [{pipeline_mode = #tpu.pipeline_mode<synchronous>, transform_indices = @transform_0, window_bounds = array<i64: 128, 128>}, {transform_indices = @transform_1, window_bounds = array<i64: 2, 128, 128>}, {pipeline_mode = #tpu.pipeline_mode<synchronous>, transform_indices = @transform_2, window_bounds = array<i64: 2, 128, 128>}, {transform_indices = @transform_3, window_bounds = array<i64: 2, 128, 128>}]} {
    %c0 = arith.constant 0 : index
    %c0_0 = arith.constant 0 : index
    %c0_1 = arith.constant 0 : index
    %0 = vector.load %arg2[%c0, %c0_0, %c0_1] : memref<2x128x128xf32, #tpu.memory_space<vmem>>, vector<2x128x128xf32>
    %1 = vector.shape_cast %0 : vector<2x128x128xf32> to vector<256x128xf32>
    %cst = arith.constant dense<0.000000e+00> : vector<2x128xf32>
    %2 = vector.multi_reduction <add>, %0, %cst [1] : vector<2x128x128xf32> to vector<2x128xf32>
    %cst_2 = arith.constant 0.000000e+00 : f32
    %3 = vector.broadcast %cst_2 : f32 to vector<2x128xf32>
    %4 = arith.cmpf oeq, %2, %3 : vector<2x128xf32>
    %cst_3 = arith.constant 1.000000e+00 : f32
    %5 = vector.broadcast %cst_3 : f32 to vector<2x128xf32>
    %6 = arith.select %4, %5, %2 : vector<2x128xi1>, vector<2x128xf32>
    %7 = tpu.reciprocal %6 : vector<2x128xf32> -> vector<2x128xf32>
    %8 = vector.shape_cast %7 : vector<2x128xf32> to vector<2x1x128xf32>
    %9 = vector.shape_cast %8 : vector<2x1x128xf32> to vector<2x1x128xf32>
    %10 = vector.broadcast %9 : vector<2x1x128xf32> to vector<2x128x128xf32>
    %c0_4 = arith.constant 0 : index
    %c0_5 = arith.constant 0 : index
    %11 = vector.load %arg1[%c0_4, %c0_5] : memref<128x128xf32, #tpu.memory_space<vmem>>, vector<128x128xf32>
    %c0_6 = arith.constant 0 : index
    %c0_7 = arith.constant 0 : index
    %c0_8 = arith.constant 0 : index
    %12 = vector.load %arg3[%c0_6, %c0_7, %c0_8] : memref<2x128x128xf32, #tpu.memory_space<vmem>>, vector<1x128x128xf32>
    %13 = vector.shape_cast %12 : vector<1x128x128xf32> to vector<128x128xf32>
    %cst_9 = arith.constant dense<0.000000e+00> : vector<128x128xf32>
    %14 = tpu.matmul %11, %13, %cst_9 {dimension_numbers = #tpu.dot_dimension_numbers<[1], [0], [0], [1], [0, 0, 1, 1], [], []>} : vector<128x128xf32>, vector<128x128xf32>, vector<128x128xf32> -> vector<128x128xf32>
    %cst_10 = arith.constant dense<0.000000e+00> : vector<256x128xf32>
    %15 = tpu.matmul %1, %14, %cst_10 {dimension_numbers = #tpu.dot_dimension_numbers<[1], [0], [0], [1], [0, 0, 1, 1], [], []>} : vector<256x128xf32>, vector<128x128xf32>, vector<256x128xf32> -> vector<256x128xf32>
    %16 = vector.shape_cast %15 : vector<256x128xf32> to vector<2x128x128xf32>
    %17 = arith.mulf %16, %10 : vector<2x128x128xf32>
    %cst_11 = arith.constant 0.000000e+00 : f32
    %18 = vector.broadcast %cst_11 : f32 to vector<2x128x128xf32>
    %19 = arith.maximumf %17, %18 : vector<2x128x128xf32>
    %20 = vector.shape_cast %19 : vector<2x128x128xf32> to vector<256x128xf32>
    %c1 = arith.constant 1 : index
    %c0_12 = arith.constant 0 : index
    %c0_13 = arith.constant 0 : index
    %21 = vector.load %arg3[%c1, %c0_12, %c0_13] : memref<2x128x128xf32, #tpu.memory_space<vmem>>, vector<1x128x128xf32>
    %22 = vector.shape_cast %21 : vector<1x128x128xf32> to vector<128x128xf32>
    %cst_14 = arith.constant dense<0.000000e+00> : vector<256x128xf32>
    %23 = tpu.matmul %20, %22, %cst_14 {dimension_numbers = #tpu.dot_dimension_numbers<[1], [0], [0], [1], [0, 0, 1, 1], [], []>} : vector<256x128xf32>, vector<128x128xf32>, vector<256x128xf32> -> vector<256x128xf32>
    %24 = vector.shape_cast %23 : vector<256x128xf32> to vector<2x128x128xf32>
    "tpu.trace_start"() <{level = 10 : i32, message = "rij,rjf->rif"}> : () -> ()
    %cst_15 = arith.constant dense<0.000000e+00> : vector<2x128x128xf32>
    %25 = tpu.matmul %0, %24, %cst_15 {dimension_numbers = #tpu.dot_dimension_numbers<[2], [1], [1], [2], [0, 0, 0, 1, 1, 2], [0], [0]>} : vector<2x128x128xf32>, vector<2x128x128xf32>, vector<2x128x128xf32> -> vector<2x128x128xf32>
    "tpu.trace_stop"() : () -> ()
    %26 = arith.mulf %25, %10 : vector<2x128x128xf32>
    %cst_16 = arith.constant 0.000000e+00 : f32
    %27 = vector.broadcast %cst_16 : f32 to vector<2x128x128xf32>
    %28 = arith.maximumf %26, %27 : vector<2x128x128xf32>
    %c0_17 = arith.constant 0 : index
    %c0_18 = arith.constant 0 : index
    %c0_19 = arith.constant 0 : index
    %29 = vector.load %arg4[%c0_17, %c0_18, %c0_19] : memref<2x128x128xf32, #tpu.memory_space<vmem>>, vector<2x128x128xf32>
    tpu.vector_store %arg4[%c0_17, %c0_18, %c0_19], %28 {strides = array<i32>} : memref<2x128x128xf32, #tpu.memory_space<vmem>>, vector<2x128x128xf32>,
    return
  }
  func.func @transform_0(%arg0: i32) -> (i32, i32) {
    %c0_i32 = arith.constant 0 : i32
    %c0_i32_0 = arith.constant 0 : i32
    %c0_i32_1 = arith.constant 0 : i32
    return %c0_i32, %c0_i32_0 : i32, i32
  }
  func.func @transform_1(%arg0: i32) -> (i32, i32, i32) {
    %c0_i32 = arith.constant 0 : i32
    %c0_i32_0 = arith.constant 0 : i32
    %c0_i32_1 = arith.constant 0 : i32
    return %arg0, %c0_i32, %c0_i32_0 : i32, i32, i32
  }
  func.func @transform_2(%arg0: i32) -> (i32, i32, i32) {
    %c0_i32 = arith.constant 0 : i32
    %c0_i32_0 = arith.constant 0 : i32
    %c0_i32_1 = arith.constant 0 : i32
    %c0_i32_2 = arith.constant 0 : i32
    return %c0_i32, %c0_i32_0, %c0_i32_1 : i32, i32, i32
  }
  func.func @transform_3(%arg0: i32) -> (i32, i32, i32) {
    %c0_i32 = arith.constant 0 : i32
    %c0_i32_0 = arith.constant 0 : i32
    %c0_i32_1 = arith.constant 0 : i32
    return %arg0, %c0_i32, %c0_i32_0 : i32, i32, i32
  }
}

</mosaic_0001>

<llo_original>
// kernel: gcn_module_pallas.1
$region0: #{gcn_module_pallas.1}
  #allocation0 [shape = 'u32[]', space=smem, size = 0x4, offset = 0x4, fixed_abs, tag = 'smem constant byte address 0x4 - core index']
  #allocation1 [shape = 'u32[144,128]{1,0:T(1,128)}', space=vmem, size = 0x12000, scoped, tag = 'internal scratch']
  %s0 = inlined_call_operand.vmem [shape: f32[128,128], index: 0, kind: input, shape index: {}]
  %s1 = inlined_call_operand.vmem [shape: f32[4,128,128], index: 1, kind: input, shape index: {}]
  %s2 = inlined_call_operand.vmem [shape: f32[2,128,128], index: 2, kind: input, shape index: {}]
  %s3 = inlined_call_operand.vmem [shape: f32[4,128,128], index: 3, kind: output, shape index: {}]
  %s4 = sld [smem:[#allocation0]]
  $region45: #{gcn_module_pallas.1} parent=0
    _
  %s6 = ssub.s32 1, %s4
  %s7 = scalar_select 0, %s6, %s4
  loop: start=0, step=1, limit=4
  $region2: #{gcn_module_pallas.1} parent=0 // loop_pre_header
    _
  $region3: #{gcn_module_pallas.1} parent=0 // loop_header
    %s9 = sphi 0, %s13
    %p10 = scmp.ge.s32.totalorder %s9, 4
    %s17 = sphi 0, %s17
    %s19 = sphi 0, %s17
    %s20 = sphi 0, %s19
    %s34 = sphi 0, %s20
    %s40 = sphi 0, %s42
    %s43 = sphi 0, %s40
    %s44 = sphi 0, %s43
    %s60 = sphi 0, %s44
    %s64 = sphi 0, %s64
    %s66 = sphi 0, %s64
    %s67 = sphi 0, %s66
    %s81 = sphi 0, %s67
    %s87 = sphi 0, %s89
    %s90 = sphi 0, %s87
    %s91 = sphi 0, %s90
    %s107 = sphi 0, %s91
  $region4: #{gcn_module_pallas.1} parent=0 // loop_header_branch
    %12 = sbr.rel (%p10) target = $region8
  $region5: #{gcn_module_pallas.1} parent=0 // loop_body
    %s14 = ssub.s32 %s9, 1
    %s15 = ssub.s32 %s9, 2
    %s16 = sadd.s32 %s9, 1
    %s18 = sadd.s32 %s17, 1
    %p21 = scmp.eq.s32.totalorder %s9, 1
    %p22 = scmp.ne.s32.totalorder %s17, %s19
    %p23 = scmp.eq.s32.totalorder %s9, 0
    %p24 = por %p22, %p23
    %p25 = scmp.ne.s32.totalorder %s17, %s19
    %p26 = scmp.eq.s32.totalorder %s14, 1
    %p27 = por %p25, %p26
    %p28 = scmp.ne.s32.totalorder %s19, %s20
    %p29 = scmp.eq.s32.totalorder %s14, 0
    %p30 = por %p28, %p29
    %p31 = scmp.ne.s32.totalorder %s19, %s20
    %p32 = scmp.eq.s32.totalorder %s15, 1
    %p33 = por %p31, %p32
    %p35 = scmp.ne.s32.totalorder %s20, %s34
    %p36 = scmp.eq.s32.totalorder %s15, 0
    %p37 = por %p35, %p36
    %s38 = ssub.s32 %s9, %s16
    %p39 = scmp.eq.s32.totalorder %s38, 0
    %s41 = sadd.s32 %s40, 1
    %s42 = scalar_select %p39, %s40, %s41
    %p45 = pneg %p39
    %p46 = scmp.eq.s32.totalorder %s9, 1
    %p47 = por %p45, %p46
    %p48 = scmp.ne.s32.totalorder %s40, %s43
    %p49 = scmp.eq.s32.totalorder %s9, 0
    %p50 = por %p48, %p49
    %p51 = scmp.ne.s32.totalorder %s40, %s43
    %p52 = scmp.eq.s32.totalorder %s14, 1
    %p53 = por %p51, %p52
    %p54 = scmp.ne.s32.totalorder %s43, %s44
    %p55 = scmp.eq.s32.totalorder %s14, 0
    %p56 = por %p54, %p55
    %p57 = scmp.ne.s32.totalorder %s43, %s44
    %p58 = scmp.eq.s32.totalorder %s15, 1
    %p59 = por %p57, %p58
    %p61 = scmp.ne.s32.totalorder %s44, %s60
    %p62 = scmp.eq.s32.totalorder %s15, 0
    %p63 = por %p61, %p62
    %s65 = sadd.s32 %s64, 1
    %p68 = scmp.eq.s32.totalorder %s9, 1
    %p69 = scmp.ne.s32.totalorder %s64, %s66
    %p70 = scmp.eq.s32.totalorder %s9, 0
    %p71 = por %p69, %p70
    %p72 = scmp.ne.s32.totalorder %s64, %s66
    %p73 = scmp.eq.s32.totalorder %s14, 1
    %p74 = por %p72, %p73
    %p75 = scmp.ne.s32.totalorder %s66, %s67
    %p76 = scmp.eq.s32.totalorder %s14, 0
    %p77 = por %p75, %p76
    %p78 = scmp.ne.s32.totalorder %s66, %s67
    %p79 = scmp.eq.s32.totalorder %s15, 1
    %p80 = por %p78, %p79
    %p82 = scmp.ne.s32.totalorder %s67, %s81
    %p83 = scmp.eq.s32.totalorder %s15, 0
    %p84 = por %p82, %p83
    %s85 = ssub.s32 %s9, %s16
    %p86 = scmp.eq.s32.totalorder %s85, 0
    %s88 = sadd.s32 %s87, 1
    %s89 = scalar_select %p86, %s87, %s88
    %p92 = pneg %p86
    %p93 = scmp.eq.s32.totalorder %s9, 1
    %p94 = por %p92, %p93
    %p95 = scmp.ne.s32.totalorder %s87, %s90
    %p96 = scmp.eq.s32.totalorder %s9, 0
    %p97 = por %p95, %p96
    %p98 = scmp.ne.s32.totalorder %s87, %s90
    %p99 = scmp.eq.s32.totalorder %s14, 1
    %p100 = por %p98, %p99
    %p101 = scmp.ne.s32.totalorder %s90, %s91
    %p102 = scmp.eq.s32.totalorder %s14, 0
    %p103 = por %p101, %p102
    %p104 = scmp.ne.s32.totalorder %s90, %s91
    %p105 = scmp.eq.s32.totalorder %s15, 1
    %p106 = por %p104, %p105
    %p108 = scmp.ne.s32.totalorder %s91, %s107
    %p109 = scmp.eq.s32.totalorder %s15, 0
    %p110 = por %p108, %p109
    %p111 = scmp.le.s32.totalorder 1, %s9
    %p112 = scmp.lt.s32.totalorder %s9, 3
    %p113 = pnand %p111, %p112
    %p114 = pneg %p113
    // Predicated region
    $region9: #{gcn_module_pallas.1} parent=5 // pred_check
      _
    $region10: #{gcn_module_pallas.1} parent=5 // pred_check_branch
      %116 = sbr.rel (%p113) target = $region12
    $region11: #{gcn_module_pallas.1} parent=5 // pred_region
      %s117 = ssub.s32 %s9, 1
      // Predicated region
      $region13: #{gcn_module_pallas.1} parent=11 // pred_check
        %p118 = pneg %p30
      $region14: #{gcn_module_pallas.1} parent=11 // pred_check_branch
        %120 = sbr.rel (%p118) target = $region16
      $region15: #{gcn_module_pallas.1} parent=11 // pred_region
        _
      $region16: #{gcn_module_pallas.1} parent=11 // pred_fallthru
        _
      // Predicated region
      $region17: #{gcn_module_pallas.1} parent=11 // pred_check
        %p121 = pneg %p77
      $region18: #{gcn_module_pallas.1} parent=11 // pred_check_branch
        %123 = sbr.rel (%p121) target = $region20
      $region19: #{gcn_module_pallas.1} parent=11 // pred_region
        _
      $region20: #{gcn_module_pallas.1} parent=11 // pred_fallthru
        _
    $region12: #{gcn_module_pallas.1} parent=5 // pred_fallthru
      _
    %p124 = scmp.lt.s32.totalorder %s9, 2
    // Predicated region
    $region21: #{gcn_module_pallas.1} parent=5 // pred_check
      %p125 = pneg %p124
    $region22: #{gcn_module_pallas.1} parent=5 // pred_check_branch
      %127 = sbr.rel (%p125) target = $region24
    $region23: #{gcn_module_pallas.1} parent=5 // pred_region
      // Predicated region
      $region25: #{gcn_module_pallas.1} parent=23 // pred_check
        %p128 = pneg %p50
      $region26: #{gcn_module_pallas.1} parent=23 // pred_check_branch
        %130 = sbr.rel (%p128) target = $region28
      $region27: #{gcn_module_pallas.1} parent=23 // pred_region
        %s131 = smul.u32 2, %s9
        %p132 = scmp.lt.s32.totalorder %s131, 3
        %s133 = scalar_select %p132, %s131, 3
        %s134 = smul.addr %s133, 16
        %s135 = smul.addr %s134, 8
        %s136 = scalar_lea.vmem %s1, %s135
        %s137 = smul.u32 2, %s9
      $region28: #{gcn_module_pallas.1} parent=23 // pred_fallthru
        _
    $region24: #{gcn_module_pallas.1} parent=5 // pred_fallthru
      _
    %p138 = scmp.le.s32.totalorder 1, %s9
    %p139 = scmp.lt.s32.totalorder %s9, 3
    %p140 = pnand %p138, %p139
    %p141 = pneg %p140
    // Predicated region
    $region29: #{gcn_module_pallas.1} parent=5 // pred_check
      _
    $region30: #{gcn_module_pallas.1} parent=5 // pred_check_branch
      %143 = sbr.rel (%p140) target = $region32
    $region31: #{gcn_module_pallas.1} parent=5 // pred_region
      %s144 = ssub.s32 %s9, 1
      %p145 = pneg %p30
      %p146 = pneg %p27
      %s147 = smul.u32 2, %s14
      %p148 = scmp.lt.s32.totalorder %s147, 3
      %s149 = scalar_select %p148, %s147, 3
      %s150 = smul.addr %s149, 16
      %s151 = smul.addr %s150, 8
      %s152 = scalar_lea.vmem %s1, %s151
      %p153 = pneg %p56
      %p154 = pneg %p53
      %p155 = pneg %p77
      %p156 = pneg %p74
      %p157 = pneg %p103
      %p158 = pneg %p100
      %s159 = smul.u32 2, %s14
      %p160 = scmp.lt.s32.totalorder %s159, 3
      %s161 = scalar_select %p160, %s159, 3
      %s162 = smul.addr %s161, 16
      %s163 = smul.addr %s162, 8
      %s164 = scalar_lea.vmem %s3, %s163
      %s165 = smul.u32 2, %s14
      %p166 = scmp.lt.s32.totalorder %s165, 3
      %s167 = scalar_select %p166, %s165, 3
      %s168 = smul.addr %s167, 16
      %s169 = smul.addr %s168, 8
      %s170 = scalar_lea.vmem %s1, %s169
      %s171 = smul.u32 2, %s14
      %s172 = smul.u32 2, %s14
      %p173 = scmp.lt.s32.totalorder %s172, 3
      %s174 = scalar_select %p173, %s172, 3
      %s175 = smul.addr %s174, 16
      %s176 = smul.addr %s175, 8
      %s177 = scalar_lea.vmem %s3, %s176
      %s178 = smul.u32 2, %s14
      %v179 = vld [vmem:[%s170] sm:$0xff]
      %v180 = vld [vmem:[%s170 + $0x8] sm:$0xff]
      %v181 = vld [vmem:[%s170 + $0x10] sm:$0xff]
      %v182 = vld [vmem:[%s170 + $0x18] sm:$0xff]
      %v183 = vld [vmem:[%s170 + $0x20] sm:$0xff]
      %v184 = vld [vmem:[%s170 + $0x28] sm:$0xff]
      %v185 = vld [vmem:[%s170 + $0x30] sm:$0xff]
      %v186 = vld [vmem:[%s170 + $0x38] sm:$0xff]
      %v187 = vld [vmem:[%s170 + $0x40] sm:$0xff]
      %v188 = vld [vmem:[%s170 + $0x48] sm:$0xff]
      %v189 = vld [vmem:[%s170 + $0x50] sm:$0xff]
      %v190 = vld [vmem:[%s170 + $0x58] sm:$0xff]
      %v191 = vld [vmem:[%s170 + $0x60] sm:$0xff]
      %v192 = vld [vmem:[%s170 + $0x68] sm:$0xff]
      %v193 = vld [vmem:[%s170 + $0x70] sm:$0xff]
      %v194 = vld [vmem:[%s170 + $0x78] sm:$0xff]
      %v195 = vld [vmem:[%s170 + $0x80] sm:$0xff]
      %v196 = vld [vmem:[%s170 + $0x88] sm:$0xff]
      %v197 = vld [vmem:[%s170 + $0x90] sm:$0xff]
      %v198 = vld [vmem:[%s170 + $0x98] sm:$0xff]
      %v199 = vld [vmem:[%s170 + $0xa0] sm:$0xff]
      %v200 = vld [vmem:[%s170 + $0xa8] sm:$0xff]
      %v201 = vld [vmem:[%s170 + $0xb0] sm:$0xff]
      %v202 = vld [vmem:[%s170 + $0xb8] sm:$0xff]
      %v203 = vld [vmem:[%s170 + $0xc0] sm:$0xff]
      %v204 = vld [vmem:[%s170 + $0xc8] sm:$0xff]
      %v205 = vld [vmem:[%s170 + $0xd0] sm:$0xff]
      %v206 = vld [vmem:[%s170 + $0xd8] sm:$0xff]
      %v207 = vld [vmem:[%s170 + $0xe0] sm:$0xff]
      %v208 = vld [vmem:[%s170 + $0xe8] sm:$0xff]
      %v209 = vld [vmem:[%s170 + $0xf0] sm:$0xff]
      %v210 = vld [vmem:[%s170 + $0xf8] sm:$0xff]
      %v211 = vadd.f32 %v179, %v180
      %v212 = vadd.f32 %v211, %v181
      %v213 = vadd.f32 %v212, %v182
      %v214 = vadd.f32 %v213, %v183
      %v215 = vadd.f32 %v214, %v184
      %v216 = vadd.f32 %v215, %v185
      %v217 = vadd.f32 %v216, %v186
      %v218 = vadd.f32 %v217, %v187
      %v219 = vadd.f32 %v218, %v188
      %v220 = vadd.f32 %v219, %v189
      %v221 = vadd.f32 %v220, %v190
      %v222 = vadd.f32 %v221, %v191
      %v223 = vadd.f32 %v222, %v192
      %v224 = vadd.f32 %v223, %v193
      %v225 = vadd.f32 %v224, %v194
      %v226 = vrot.slane %v225, 4
      %v227 = vadd.f32 %v225, %v226
      %v228 = vrot.slane %v227, 2
      %v229 = vadd.f32 %v227, %v228
      %v230 = vrot.slane %v229, 1
      %v231 = vadd.f32 %v229, %v230
      %v232 = vadd.f32 %v195, %v196
      %v233 = vadd.f32 %v232, %v197
      %v234 = vadd.f32 %v233, %v198
      %v235 = vadd.f32 %v234, %v199
      %v236 = vadd.f32 %v235, %v200
      %v237 = vadd.f32 %v236, %v201
      %v238 = vadd.f32 %v237, %v202
      %v239 = vadd.f32 %v238, %v203
      %v240 = vadd.f32 %v239, %v204
      %v241 = vadd.f32 %v240, %v205
      %v242 = vadd.f32 %v241, %v206
      %v243 = vadd.f32 %v242, %v207
      %v244 = vadd.f32 %v243, %v208
      %v245 = vadd.f32 %v244, %v209
      %v246 = vadd.f32 %v245, %v210
      %v247 = vrot.slane %v246, 4
      %v248 = vadd.f32 %v246, %v247
      %v249 = vrot.slane %v248, 2
      %v250 = vadd.f32 %v248, %v249
      %v251 = vrot.slane %v250, 1
      %v252 = vadd.f32 %v250, %v251
      %vm253 = vcmp.eq.f32.partialorder %v231, 0.0
      %vm254 = vcmp.eq.f32.partialorder %v252, 0.0
      %v255 = vsel %vm253, 1.0, %v231
      %v256 = vsel %vm254, 1.0, %v252
      %v257 = vrcp.pop %v255
      %v258 = vrcp.pop %v256
      %v259 = vld [vmem:[%s0] sm:$0xff]
      %v260 = vld [vmem:[%s0 + $0x8] sm:$0xff]
      %v261 = vld [vmem:[%s0 + $0x10] sm:$0xff]
      %v262 = vld [vmem:[%s0 + $0x18] sm:$0xff]
      %v263 = vld [vmem:[%s0 + $0x20] sm:$0xff]
      %v264 = vld [vmem:[%s0 + $0x28] sm:$0xff]
      %v265 = vld [vmem:[%s0 + $0x30] sm:$0xff]
      %v266 = vld [vmem:[%s0 + $0x38] sm:$0xff]
      %v267 = vld [vmem:[%s0 + $0x40] sm:$0xff]
      %v268 = vld [vmem:[%s0 + $0x48] sm:$0xff]
      %v269 = vld [vmem:[%s0 + $0x50] sm:$0xff]
      %v270 = vld [vmem:[%s0 + $0x58] sm:$0xff]
      %v271 = vld [vmem:[%s0 + $0x60] sm:$0xff]
      %v272 = vld [vmem:[%s0 + $0x68] sm:$0xff]
      %v273 = vld [vmem:[%s0 + $0x70] sm:$0xff]
      %v274 = vld [vmem:[%s0 + $0x78] sm:$0xff]
      %v275 = vld [vmem:[%s2] sm:$0xff]
      %v276 = vld [vmem:[%s2 + $0x8] sm:$0xff]
      %v277 = vld [vmem:[%s2 + $0x10] sm:$0xff]
      %v278 = vld [vmem:[%s2 + $0x18] sm:$0xff]
      %v279 = vld [vmem:[%s2 + $0x20] sm:$0xff]
      %v280 = vld [vmem:[%s2 + $0x28] sm:$0xff]
      %v281 = vld [vmem:[%s2 + $0x30] sm:$0xff]
      %v282 = vld [vmem:[%s2 + $0x38] sm:$0xff]
      %v283 = vld [vmem:[%s2 + $0x40] sm:$0xff]
      %v284 = vld [vmem:[%s2 + $0x48] sm:$0xff]
      %v285 = vld [vmem:[%s2 + $0x50] sm:$0xff]
      %v286 = vld [vmem:[%s2 + $0x58] sm:$0xff]
      %v287 = vld [vmem:[%s2 + $0x60] sm:$0xff]
      %v288 = vld [vmem:[%s2 + $0x68] sm:$0xff]
      %v289 = vld [vmem:[%s2 + $0x70] sm:$0xff]
      %v290 = vld [vmem:[%s2 + $0x78] sm:$0xff]
      %291 = vmatprep.subr.mxu0 0.0
      %292 = vmatpush1.msra.mxu0 %v275
      %293 = vmatprep.subr.mxu0 0.0
      %294 = vmatpush1.msra.mxu0 %v276
      %295 = vmatprep.subr.mxu0 0.0
      %296 = vmatpush1.msra.mxu0 %v277
      %297 = vmatprep.subr.mxu0 0.0
      %298 = vmatpush1.msra.mxu0 %v278
      %299 = vmatprep.subr.mxu0 0.0
      %300 = vmatpush1.msra.mxu0 %v279
      %301 = vmatprep.subr.mxu0 0.0
      %302 = vmatpush1.msra.mxu0 %v280
      %303 = vmatprep.subr.mxu0 0.0
      %304 = vmatpush1.msra.mxu0 %v281
      %305 = vmatprep.subr.mxu0 0.0
      %306 = vmatpush1.msra.mxu0 %v282
      %307 = vmatprep.subr.mxu0 0.0
      %308 = vmatpush1.msra.mxu0 %v283
      %309 = vmatprep.subr.mxu0 0.0
      %310 = vmatpush1.msra.mxu0 %v284
      %311 = vmatprep.subr.mxu0 0.0
      %312 = vmatpush1.msra.mxu0 %v285
      %313 = vmatprep.subr.mxu0 0.0
      %314 = vmatpush1.msra.mxu0 %v286
      %315 = vmatprep.subr.mxu0 0.0
      %316 = vmatpush1.msra.mxu0 %v287
      %317 = vmatprep.subr.mxu0 0.0
      %318 = vmatpush1.msra.mxu0 %v288
      %319 = vmatprep.subr.mxu0 0.0
      %320 = vmatpush1.msra.mxu0 %v289
      %321 = vmatprep.subr.mxu0 0.0
      %322 = vmatpush1.msra.mxu0 %v290
      %323 = vmatprep.subr.mxu0 0.0
      %324 = vmatpush1.msra.mxu0 0.0
      %325 = vmatprep.subr.mxu0 0.0
      %326 = vmatpush1.msra.mxu0 0.0
      %327 = vmatprep.subr.mxu0 0.0
      %328 = vmatpush1.msra.mxu0 0.0
      %329 = vmatprep.subr.mxu0 0.0
      %330 = vmatpush1.msra.mxu0 0.0
      %331 = vmatprep.subr.mxu0 0.0
      %332 = vmatpush1.msra.mxu0 0.0
      %333 = vmatprep.subr.mxu0 0.0
      %334 = vmatpush1.msra.mxu0 0.0
      %335 = vmatprep.subr.mxu0 0.0
      %336 = vmatpush1.msra.mxu0 0.0
      %337 = vmatprep.subr.mxu0 0.0
      %338 = vmatpush1.msra.mxu0 0.0
      %339 = vmatprep.subr.mxu0 0.0
      %340 = vmatpush1.msra.mxu0 0.0
      %341 = vmatprep.subr.mxu0 0.0
      %342 = vmatpush1.msra.mxu0 0.0
      %343 = vmatprep.subr.mxu0 0.0
      %344 = vmatpush1.msra.mxu0 0.0
      %345 = vmatprep.subr.mxu0 0.0
      %346 = vmatpush1.msra.mxu0 0.0
      %347 = vmatprep.subr.mxu0 0.0
      %348 = vmatpush1.msra.mxu0 0.0
      %349 = vmatprep.subr.mxu0 0.0
      %350 = vmatpush1.msra.mxu0 0.0
      %351 = vmatprep.subr.mxu0 0.0
      %352 = vmatpush1.msra.mxu0 0.0
      %353 = vmatprep.subr.mxu0 0.0
      %354 = vmatpush1.msra.mxu0 0.0
      %355 = vmatprep.mubr.f32.mxu0 0.0
      %356 = vmatmul.mubr.f32.gmra.mrb[0].mxu0 %v259
      %v357 = vpop.f32.mrb[0].mxu0
      %v358 = vadd.f32 0.0, %v357
      %v359 = vpop.f32.mrb[0].mxu0
      %360 = vmatprep.mubr.f32.mxu0 0.0
      %361 = vmatmul.mubr.f32.gmra.mrb[0].mxu0 %v260
      %v362 = vpop.f32.mrb[0].mxu0
      %v363 = vadd.f32 0.0, %v362
      %v364 = vpop.f32.mrb[0].mxu0
      %365 = vmatprep.mubr.f32.mxu0 0.0
      %366 = vmatmul.mubr.f32.gmra.mrb[0].mxu0 %v261
      %v367 = vpop.f32.mrb[0].mxu0
      %v368 = vadd.f32 0.0, %v367
      %v369 = vpop.f32.mrb[0].mxu0
      %370 = vmatprep.mubr.f32.mxu0 0.0
      %371 = vmatmul.mubr.f32.gmra.mrb[0].mxu0 %v262
      %v372 = vpop.f32.mrb[0].mxu0
      %v373 = vadd.f32 0.0, %v372
      %v374 = vpop.f32.mrb[0].mxu0
      %375 = vmatprep.mubr.f32.mxu0 0.0
      %376 = vmatmul.mubr.f32.gmra.mrb[0].mxu0 %v263
      %v377 = vpop.f32.mrb[0].mxu0
      %v378 = vadd.f32 0.0, %v377
      %v379 = vpop.f32.mrb[0].mxu0
      %380 = vmatprep.mubr.f32.mxu0 0.0
      %381 = vmatmul.mubr.f32.gmra.mrb[0].mxu0 %v264
      %v382 = vpop.f32.mrb[0].mxu0
      %v383 = vadd.f32 0.0, %v382
      %v384 = vpop.f32.mrb[0].mxu0
      %385 = vmatprep.mubr.f32.mxu0 0.0
      %386 = vmatmul.mubr.f32.gmra.mrb[0].mxu0 %v265
      %v387 = vpop.f32.mrb[0].mxu0
      %v388 = vadd.f32 0.0, %v387
      %v389 = vpop.f32.mrb[0].mxu0
      %390 = vmatprep.mubr.f32.mxu0 0.0
      %391 = vmatmul.mubr.f32.gmra.mrb[0].mxu0 %v266
      %v392 = vpop.f32.mrb[0].mxu0
      %v393 = vadd.f32 0.0, %v392
      %v394 = vpop.f32.mrb[0].mxu0
      %395 = vmatprep.mubr.f32.mxu0 0.0
      %396 = vmatmul.mubr.f32.gmra.mrb[0].mxu0 %v267
      %v397 = vpop.f32.mrb[0].mxu0
      %v398 = vadd.f32 0.0, %v397
      %v399 = vpop.f32.mrb[0].mxu0
      %400 = vmatprep.mubr.f32.mxu0 0.0
      %401 = vmatmul.mubr.f32.gmra.mrb[0].mxu0 %v268
      %v402 = vpop.f32.mrb[0].mxu0
      %v403 = vadd.f32 0.0, %v402
      %v404 = vpop.f32.mrb[0].mxu0
      %405 = vmatprep.mubr.f32.mxu0 0.0
      %406 = vmatmul.mubr.f32.gmra.mrb[0].mxu0 %v269
      %v407 = vpop.f32.mrb[0].mxu0
      %v408 = vadd.f32 0.0, %v407
      %v409 = vpop.f32.mrb[0].mxu0
      %410 = vmatprep.mubr.f32.mxu0 0.0
      %411 = vmatmul.mubr.f32.gmra.mrb[0].mxu0 %v270
      %v412 = vpop.f32.mrb[0].mxu0
      %v413 = vadd.f32 0.0, %v412
      %v414 = vpop.f32.mrb[0].mxu0
      %415 = vmatprep.mubr.f32.mxu0 0.0
      %416 = vmatmul.mubr.f32.gmra.mrb[0].mxu0 %v271
      %v417 = vpop.f32.mrb[0].mxu0
      %v418 = vadd.f32 0.0, %v417
      %v419 = vpop.f32.mrb[0].mxu0
      %420 = vmatprep.mubr.f32.mxu0 0.0
      %421 = vmatmul.mubr.f32.gmra.mrb[0].mxu0 %v272
      %v422 = vpop.f32.mrb[0].mxu0
      %v423 = vadd.f32 0.0, %v422
      %v424 = vpop.f32.mrb[0].mxu0
      %425 = vmatprep.mubr.f32.mxu0 0.0
      %426 = vmatmul.mubr.f32.gmra.mrb[0].mxu0 %v273
      %v427 = vpop.f32.mrb[0].mxu0
      %v428 = vadd.f32 0.0, %v427
      %v429 = vpop.f32.mrb[0].mxu0
      %430 = vmatprep.mubr.f32.mxu0 0.0
      %431 = vmatmul.mubr.f32.gmra.mrb[0].mxu0 %v274
      %v432 = vpop.f32.mrb[0].mxu0
      %v433 = vadd.f32 0.0, %v432
      %v434 = vpop.f32.mrb[0].mxu0
      %435 = vdwg.mxu0
      %436 = vmatprep.subr.mxu0 0.0
      %437 = vmatpush1.msra.mxu0 %v358
      %438 = vmatprep.subr.mxu0 0.0
      %439 = vmatpush1.msra.mxu0 %v363
      %440 = vmatprep.subr.mxu0 0.0
      %441 = vmatpush1.msra.mxu0 %v368
      %442 = vmatprep.subr.mxu0 0.0
      %443 = vmatpush1.msra.mxu0 %v373
      %444 = vmatprep.subr.mxu0 0.0
      %445 = vmatpush1.msra.mxu0 %v378
      %446 = vmatprep.subr.mxu0 0.0
      %447 = vmatpush1.msra.mxu0 %v383
      %448 = vmatprep.subr.mxu0 0.0
      %449 = vmatpush1.msra.mxu0 %v388
      %450 = vmatprep.subr.mxu0 0.0
      %451 = vmatpush1.msra.mxu0 %v393
      %452 = vmatprep.subr.mxu0 0.0
      %453 = vmatpush1.msra.mxu0 %v398
      %454 = vmatprep.subr.mxu0 0.0
      %455 = vmatpush1.msra.mxu0 %v403
      %456 = vmatprep.subr.mxu0 0.0
      %457 = vmatpush1.msra.mxu0 %v408
      %458 = vmatprep.subr.mxu0 0.0
      %459 = vmatpush1.msra.mxu0 %v413
      %460 = vmatprep.subr.mxu0 0.0
      %461 = vmatpush1.msra.mxu0 %v418
      %462 = vmatprep.subr.mxu0 0.0
      %463 = vmatpush1.msra.mxu0 %v423
      %464 = vmatprep.subr.mxu0 0.0
      %465 = vmatpush1.msra.mxu0 %v428
      %466 = vmatprep.subr.mxu0 0.0
      %467 = vmatpush1.msra.mxu0 %v433
      %468 = vmatprep.subr.mxu0 0.0
      %469 = vmatpush1.msra.mxu0 0.0
      %470 = vmatprep.subr.mxu0 0.0
      %471 = vmatpush1.msra.mxu0 0.0
      %472 = vmatprep.subr.mxu0 0.0
      %473 = vmatpush1.msra.mxu0 0.0
      %474 = vmatprep.subr.mxu0 0.0
      %475 = vmatpush1.msra.mxu0 0.0
      %476 = vmatprep.subr.mxu0 0.0
      %477 = vmatpush1.msra.mxu0 0.0
      %478 = vmatprep.subr.mxu0 0.0
      %479 = vmatpush1.msra.mxu0 0.0
      %480 = vmatprep.subr.mxu0 0.0
      %481 = vmatpush1.msra.mxu0 0.0
      %482 = vmatprep.subr.mxu0 0.0
      %483 = vmatpush1.msra.mxu0 0.0
      %484 = vmatprep.subr.mxu0 0.0
      %485 = vmatpush1.msra.mxu0 0.0
      %486 = vmatprep.subr.mxu0 0.0
      %487 = vmatpush1.msra.mxu0 0.0
      %488 = vmatprep.subr.mxu0 0.0
      %489 = vmatpush1.msra.mxu0 0.0
      %490 = vmatprep.subr.mxu0 0.0
      %491 = vmatpush1.msra.mxu0 0.0
      %492 = vmatprep.subr.mxu0 0.0
      %493 = vmatpush1.msra.mxu0 0.0
      %494 = vmatprep.subr.mxu0 0.0
      %495 = vmatpush1.msra.mxu0 0.0
      %496 = vmatprep.subr.mxu0 0.0
      %497 = vmatpush1.msra.mxu0 0.0
      %498 = vmatprep.subr.mxu0 0.0
      %499 = vmatpush1.msra.mxu0 0.0
      %500 = vmatprep.mubr.f32.mxu0 0.0
      %501 = vmatmul.mubr.f32.gmra.mrb[0].mxu0 %v179
      %v502 = vpop.f32.mrb[0].mxu0
      %v503 = vadd.f32 0.0, %v502
      %v504 = vpop.f32.mrb[0].mxu0
      %505 = vmatprep.mubr.f32.mxu0 0.0
      %506 = vmatmul.mubr.f32.gmra.mrb[0].mxu0 %v180
      %v507 = vpop.f32.mrb[0].mxu0
      %v508 = vadd.f32 0.0, %v507
      %v509 = vpop.f32.mrb[0].mxu0
      %510 = vmatprep.mubr.f32.mxu0 0.0
      %511 = vmatmul.mubr.f32.gmra.mrb[0].mxu0 %v181
      %v512 = vpop.f32.mrb[0].mxu0
      %v513 = vadd.f32 0.0, %v512
      %v514 = vpop.f32.mrb[0].mxu0
      %515 = vmatprep.mubr.f32.mxu0 0.0
      %516 = vmatmul.mubr.f32.gmra.mrb[0].mxu0 %v182
      %v517 = vpop.f32.mrb[0].mxu0
      %v518 = vadd.f32 0.0, %v517
      %v519 = vpop.f32.mrb[0].mxu0
      %520 = vmatprep.mubr.f32.mxu0 0.0
      %521 = vmatmul.mubr.f32.gmra.mrb[0].mxu0 %v183
      %v522 = vpop.f32.mrb[0].mxu0
      %v523 = vadd.f32 0.0, %v522
      %v524 = vpop.f32.mrb[0].mxu0
      %525 = vmatprep.mubr.f32.mxu0 0.0
      %526 = vmatmul.mubr.f32.gmra.mrb[0].mxu0 %v184
      %v527 = vpop.f32.mrb[0].mxu0
      %v528 = vadd.f32 0.0, %v527
      %v529 = vpop.f32.mrb[0].mxu0
      %530 = vmatprep.mubr.f32.mxu0 0.0
      %531 = vmatmul.mubr.f32.gmra.mrb[0].mxu0 %v185
      %v532 = vpop.f32.mrb[0].mxu0
      %v533 = vadd.f32 0.0, %v532
      %v534 = vpop.f32.mrb[0].mxu0
      %535 = vmatprep.mubr.f32.mxu0 0.0
      %536 = vmatmul.mubr.f32.gmra.mrb[0].mxu0 %v186
      %v537 = vpop.f32.mrb[0].mxu0
      %v538 = vadd.f32 0.0, %v537
      %v539 = vpop.f32.mrb[0].mxu0
      %540 = vmatprep.mubr.f32.mxu0 0.0
      %541 = vmatmul.mubr.f32.gmra.mrb[0].mxu0 %v187
      %v542 = vpop.f32.mrb[0].mxu0
      %v543 = vadd.f32 0.0, %v542
      %v544 = vpop.f32.mrb[0].mxu0
      %545 = vmatprep.mubr.f32.mxu0 0.0
      %546 = vmatmul.mubr.f32.gmra.mrb[0].mxu0 %v188
      %v547 = vpop.f32.mrb[0].mxu0
      %v548 = vadd.f32 0.0, %v547
      %v549 = vpop.f32.mrb[0].mxu0
      %550 = vmatprep.mubr.f32.mxu0 0.0
      %551 = vmatmul.mubr.f32.gmra.mrb[0].mxu0 %v189
      %v552 = vpop.f32.mrb[0].mxu0
      %v553 = vadd.f32 0.0, %v552
      %v554 = vpop.f32.mrb[0].mxu0
      %555 = vmatprep.mubr.f32.mxu0 0.0
      %556 = vmatmul.mubr.f32.gmra.mrb[0].mxu0 %v190
      %v557 = vpop.f32.mrb[0].mxu0
      %v558 = vadd.f32 0.0, %v557
      %v559 = vpop.f32.mrb[0].mxu0
      %560 = vmatprep.mubr.f32.mxu0 0.0
      %561 = vmatmul.mubr.f32.gmra.mrb[0].mxu0 %v191
      %v562 = vpop.f32.mrb[0].mxu0
      %v563 = vadd.f32 0.0, %v562
      %v564 = vpop.f32.mrb[0].mxu0
      %565 = vmatprep.mubr.f32.mxu0 0.0
      %566 = vmatmul.mubr.f32.gmra.mrb[0].mxu0 %v192
      %v567 = vpop.f32.mrb[0].mxu0
      %v568 = vadd.f32 0.0, %v567
      %v569 = vpop.f32.mrb[0].mxu0
      %570 = vmatprep.mubr.f32.mxu0 0.0
      %571 = vmatmul.mubr.f32.gmra.mrb[0].mxu0 %v193
      %v572 = vpop.f32.mrb[0].mxu0
      %v573 = vadd.f32 0.0, %v572
      %v574 = vpop.f32.mrb[0].mxu0
      %575 = vmatprep.mubr.f32.mxu0 0.0
      %576 = vmatmul.mubr.f32.gmra.mrb[0].mxu0 %v194
      %v577 = vpop.f32.mrb[0].mxu0
      %v578 = vadd.f32 0.0, %v577
      %v579 = vpop.f32.mrb[0].mxu0
      %580 = vmatprep.mubr.f32.mxu0 0.0
      %581 = vmatmul.mubr.f32.gmra.mrb[0].mxu0 %v195
      %v582 = vpop.f32.mrb[0].mxu0
      %v583 = vadd.f32 0.0, %v582
      %v584 = vpop.f32.mrb[0].mxu0
      %585 = vmatprep.mubr.f32.mxu0 0.0
      %586 = vmatmul.mubr.f32.gmra.mrb[0].mxu0 %v196
      %v587 = vpop.f32.mrb[0].mxu0
      %v588 = vadd.f32 0.0, %v587
      %v589 = vpop.f32.mrb[0].mxu0
      %590 = vmatprep.mubr.f32.mxu0 0.0
      %591 = vmatmul.mubr.f32.gmra.mrb[0].mxu0 %v197
      %v592 = vpop.f32.mrb[0].mxu0
      %v593 = vadd.f32 0.0, %v592
      %v594 = vpop.f32.mrb[0].mxu0
      %595 = vmatprep.mubr.f32.mxu0 0.0
      %596 = vmatmul.mubr.f32.gmra.mrb[0].mxu0 %v198
      %v597 = vpop.f32.mrb[0].mxu0
      %v598 = vadd.f32 0.0, %v597
      %v599 = vpop.f32.mrb[0].mxu0
      %600 = vmatprep.mubr.f32.mxu0 0.0
      %601 = vmatmul.mubr.f32.gmra.mrb[0].mxu0 %v199
      %v602 = vpop.f32.mrb[0].mxu0
      %v603 = vadd.f32 0.0, %v602
      %v604 = vpop.f32.mrb[0].mxu0
      %605 = vmatprep.mubr.f32.mxu0 0.0
      %606 = vmatmul.mubr.f32.gmra.mrb[0].mxu0 %v200
      %v607 = vpop.f32.mrb[0].mxu0
      %v608 = vadd.f32 0.0, %v607
      %v609 = vpop.f32.mrb[0].mxu0
      %610 = vmatprep.mubr.f32.mxu0 0.0
      %611 = vmatmul.mubr.f32.gmra.mrb[0].mxu0 %v201
      %v612 = vpop.f32.mrb[0].mxu0
      %v613 = vadd.f32 0.0, %v612
      %v614 = vpop.f32.mrb[0].mxu0
      %615 = vmatprep.mubr.f32.mxu0 0.0
      %616 = vmatmul.mubr.f32.gmra.mrb[0].mxu0 %v202
      %v617 = vpop.f32.mrb[0].mxu0
      %v618 = vadd.f32 0.0, %v617
      %v619 = vpop.f32.mrb[0].mxu0
      %620 = vmatprep.mubr.f32.mxu0 0.0
      %621 = vmatmul.mubr.f32.gmra.mrb[0].mxu0 %v203
      %v622 = vpop.f32.mrb[0].mxu0
      %v623 = vadd.f32 0.0, %v622
      %v624 = vpop.f32.mrb[0].mxu0
      %625 = vmatprep.mubr.f32.mxu0 0.0
      %626 = vmatmul.mubr.f32.gmra.mrb[0].mxu0 %v204
      %v627 = vpop.f32.mrb[0].mxu0
      %v628 = vadd.f32 0.0, %v627
      %v629 = vpop.f32.mrb[0].mxu0
      %630 = vmatprep.mubr.f32.mxu0 0.0
      %631 = vmatmul.mubr.f32.gmra.mrb[0].mxu0 %v205
      %v632 = vpop.f32.mrb[0].mxu0
      %v633 = vadd.f32 0.0, %v632
      %v634 = vpop.f32.mrb[0].mxu0
      %635 = vmatprep.mubr.f32.mxu0 0.0
      %636 = vmatmul.mubr.f32.gmra.mrb[0].mxu0 %v206
      %v637 = vpop.f32.mrb[0].mxu0
      %v638 = vadd.f32 0.0, %v637
      %v639 = vpop.f32.mrb[0].mxu0
      %640 = vmatprep.mubr.f32.mxu0 0.0
      %641 = vmatmul.mubr.f32.gmra.mrb[0].mxu0 %v207
      %v642 = vpop.f32.mrb[0].mxu0
      %v643 = vadd.f32 0.0, %v642
      %v644 = vpop.f32.mrb[0].mxu0
      %645 = vmatprep.mubr.f32.mxu0 0.0
      %646 = vmatmul.mubr.f32.gmra.mrb[0].mxu0 %v208
      %v647 = vpop.f32.mrb[0].mxu0
      %v648 = vadd.f32 0.0, %v647
      %v649 = vpop.f32.mrb[0].mxu0
      %650 = vmatprep.mubr.f32.mxu0 0.0
      %651 = vmatmul.mubr.f32.gmra.mrb[0].mxu0 %v209
      %v652 = vpop.f32.mrb[0].mxu0
      %v653 = vadd.f32 0.0, %v652
      %v654 = vpop.f32.mrb[0].mxu0
      %655 = vmatprep.mubr.f32.mxu0 0.0
      %656 = vmatmul.mubr.f32.gmra.mrb[0].mxu0 %v210
      %v657 = vpop.f32.mrb[0].mxu0
      %v658 = vadd.f32 0.0, %v657
      %v659 = vpop.f32.mrb[0].mxu0
      %660 = vdwg.mxu0
      %v661 = vmul.f32 %v503, %v257
      %v662 = vmul.f32 %v508, %v257
      %v663 = vmul.f32 %v513, %v257
      %v664 = vmul.f32 %v518, %v257
      %v665 = vmul.f32 %v523, %v257
      %v666 = vmul.f32 %v528, %v257
      %v667 = vmul.f32 %v533, %v257
      %v668 = vmul.f32 %v538, %v257
      %v669 = vmul.f32 %v543, %v257
      %v670 = vmul.f32 %v548, %v257
      %v671 = vmul.f32 %v553, %v257
      %v672 = vmul.f32 %v558, %v257
      %v673 = vmul.f32 %v563, %v257
      %v674 = vmul.f32 %v568, %v257
      %v675 = vmul.f32 %v573, %v257
      %v676 = vmul.f32 %v578, %v257
      %v677 = vmul.f32 %v583, %v258
      %v678 = vmul.f32 %v588, %v258
      %v679 = vmul.f32 %v593, %v258
      %v680 = vmul.f32 %v598, %v258
      %v681 = vmul.f32 %v603, %v258
      %v682 = vmul.f32 %v608, %v258
      %v683 = vmul.f32 %v613, %v258
      %v684 = vmul.f32 %v618, %v258
      %v685 = vmul.f32 %v623, %v258
      %v686 = vmul.f32 %v628, %v258
      %v687 = vmul.f32 %v633, %v258
      %v688 = vmul.f32 %v638, %v258
      %v689 = vmul.f32 %v643, %v258
      %v690 = vmul.f32 %v648, %v258
      %v691 = vmul.f32 %v653, %v258
      %v692 = vmul.f32 %v658, %v258
      %v693 = vmax.f32 %v661, 0.0
      %v694 = vmax.f32 %v662, 0.0
      %v695 = vmax.f32 %v663, 0.0
      %v696 = vmax.f32 %v664, 0.0
      %v697 = vmax.f32 %v665, 0.0
      %v698 = vmax.f32 %v666, 0.0
      %v699 = vmax.f32 %v667, 0.0
      %v700 = vmax.f32 %v668, 0.0
      %v701 = vmax.f32 %v669, 0.0
      %v702 = vmax.f32 %v670, 0.0
      %v703 = vmax.f32 %v671, 0.0
      %v704 = vmax.f32 %v672, 0.0
      %v705 = vmax.f32 %v673, 0.0
      %v706 = vmax.f32 %v674, 0.0
      %v707 = vmax.f32 %v675, 0.0
      %v708 = vmax.f32 %v676, 0.0
      %v709 = vmax.f32 %v677, 0.0
      %v710 = vmax.f32 %v678, 0.0
      %v711 = vmax.f32 %v679, 0.0
      %v712 = vmax.f32 %v680, 0.0
      %v713 = vmax.f32 %v681, 0.0
      %v714 = vmax.f32 %v682, 0.0
      %v715 = vmax.f32 %v683, 0.0
      %v716 = vmax.f32 %v684, 0.0
      %v717 = vmax.f32 %v685, 0.0
      %v718 = vmax.f32 %v686, 0.0
      %v719 = vmax.f32 %v687, 0.0
      %v720 = vmax.f32 %v688, 0.0
      %v721 = vmax.f32 %v689, 0.0
      %v722 = vmax.f32 %v690, 0.0
      %v723 = vmax.f32 %v691, 0.0
      %v724 = vmax.f32 %v692, 0.0
      %s725 = scalar_lea.vmem %s2, 128
      %v726 = vld [vmem:[%s725] sm:$0xff]
      %v727 = vld [vmem:[%s725 + $0x8] sm:$0xff]
      %v728 = vld [vmem:[%s725 + $0x10] sm:$0xff]
      %v729 = vld [vmem:[%s725 + $0x18] sm:$0xff]
      %v730 = vld [vmem:[%s725 + $0x20] sm:$0xff]
      %v731 = vld [vmem:[%s725 + $0x28] sm:$0xff]
      %v732 = vld [vmem:[%s725 + $0x30] sm:$0xff]
      %v733 = vld [vmem:[%s725 + $0x38] sm:$0xff]
      %v734 = vld [vmem:[%s725 + $0x40] sm:$0xff]
      %v735 = vld [vmem:[%s725 + $0x48] sm:$0xff]
      %v736 = vld [vmem:[%s725 + $0x50] sm:$0xff]
      %v737 = vld [vmem:[%s725 + $0x58] sm:$0xff]
      %v738 = vld [vmem:[%s725 + $0x60] sm:$0xff]
      %v739 = vld [vmem:[%s725 + $0x68] sm:$0xff]
      %v740 = vld [vmem:[%s725 + $0x70] sm:$0xff]
      %v741 = vld [vmem:[%s725 + $0x78] sm:$0xff]
      %742 = vmatprep.subr.mxu0 0.0
      %743 = vmatpush1.msra.mxu0 %v726
      %744 = vmatprep.subr.mxu0 0.0
      %745 = vmatpush1.msra.mxu0 %v727
      %746 = vmatprep.subr.mxu0 0.0
      %747 = vmatpush1.msra.mxu0 %v728
      %748 = vmatprep.subr.mxu0 0.0
      %749 = vmatpush1.msra.mxu0 %v729
      %750 = vmatprep.subr.mxu0 0.0
      %751 = vmatpush1.msra.mxu0 %v730
      %752 = vmatprep.subr.mxu0 0.0
      %753 = vmatpush1.msra.mxu0 %v731
      %754 = vmatprep.subr.mxu0 0.0
      %755 = vmatpush1.msra.mxu0 %v732
      %756 = vmatprep.subr.mxu0 0.0
      %757 = vmatpush1.msra.mxu0 %v733
      %758 = vmatprep.subr.mxu0 0.0
      %759 = vmatpush1.msra.mxu0 %v734
      %760 = vmatprep.subr.mxu0 0.0
      %761 = vmatpush1.msra.mxu0 %v735
      %762 = vmatprep.subr.mxu0 0.0
      %763 = vmatpush1.msra.mxu0 %v736
      %764 = vmatprep.subr.mxu0 0.0
      %765 = vmatpush1.msra.mxu0 %v737
      %766 = vmatprep.subr.mxu0 0.0
      %767 = vmatpush1.msra.mxu0 %v738
      %768 = vmatprep.subr.mxu0 0.0
      %769 = vmatpush1.msra.mxu0 %v739
      %770 = vmatprep.subr.mxu0 0.0
      %771 = vmatpush1.msra.mxu0 %v740
      %772 = vmatprep.subr.mxu0 0.0
      %773 = vmatpush1.msra.mxu0 %v741
      %774 = vmatprep.subr.mxu0 0.0
      %775 = vmatpush1.msra.mxu0 0.0
      %776 = vmatprep.subr.mxu0 0.0
      %777 = vmatpush1.msra.mxu0 0.0
      %778 = vmatprep.subr.mxu0 0.0
      %779 = vmatpush1.msra.mxu0 0.0
      %780 = vmatprep.subr.mxu0 0.0
      %781 = vmatpush1.msra.mxu0 0.0
      %782 = vmatprep.subr.mxu0 0.0
      %783 = vmatpush1.msra.mxu0 0.0
      %784 = vmatprep.subr.mxu0 0.0
      %785 = vmatpush1.msra.mxu0 0.0
      %786 = vmatprep.subr.mxu0 0.0
      %787 = vmatpush1.msra.mxu0 0.0
      %788 = vmatprep.subr.mxu0 0.0
      %789 = vmatpush1.msra.mxu0 0.0
      %790 = vmatprep.subr.mxu0 0.0
      %791 = vmatpush1.msra.mxu0 0.0
      %792 = vmatprep.subr.mxu0 0.0
      %793 = vmatpush1.msra.mxu0 0.0
      %794 = vmatprep.subr.mxu0 0.0
      %795 = vmatpush1.msra.mxu0 0.0
      %796 = vmatprep.subr.mxu0 0.0
      %797 = vmatpush1.msra.mxu0 0.0
      %798 = vmatprep.subr.mxu0 0.0
      %799 = vmatpush1.msra.mxu0 0.0
      %800 = vmatprep.subr.mxu0 0.0
      %801 = vmatpush1.msra.mxu0 0.0
      %802 = vmatprep.subr.mxu0 0.0
      %803 = vmatpush1.msra.mxu0 0.0
      %804 = vmatprep.subr.mxu0 0.0
      %805 = vmatpush1.msra.mxu0 0.0
      %806 = vmatprep.mubr.f32.mxu0 0.0
      %807 = vmatmul.mubr.f32.gmra.mrb[0].mxu0 %v693
      %v808 = vpop.f32.mrb[0].mxu0
      %v809 = vadd.f32 0.0, %v808
      %v810 = vpop.f32.mrb[0].mxu0
      %811 = vmatprep.mubr.f32.mxu0 0.0
      %812 = vmatmul.mubr.f32.gmra.mrb[0].mxu0 %v694
      %v813 = vpop.f32.mrb[0].mxu0
      %v814 = vadd.f32 0.0, %v813
      %v815 = vpop.f32.mrb[0].mxu0
      %816 = vmatprep.mubr.f32.mxu0 0.0
      %817 = vmatmul.mubr.f32.gmra.mrb[0].mxu0 %v695
      %v818 = vpop.f32.mrb[0].mxu0
      %v819 = vadd.f32 0.0, %v818
      %v820 = vpop.f32.mrb[0].mxu0
      %821 = vmatprep.mubr.f32.mxu0 0.0
      %822 = vmatmul.mubr.f32.gmra.mrb[0].mxu0 %v696
      %v823 = vpop.f32.mrb[0].mxu0
      %v824 = vadd.f32 0.0, %v823
      %v825 = vpop.f32.mrb[0].mxu0
      %826 = vmatprep.mubr.f32.mxu0 0.0
      %827 = vmatmul.mubr.f32.gmra.mrb[0].mxu0 %v697
      %v828 = vpop.f32.mrb[0].mxu0
      %v829 = vadd.f32 0.0, %v828
      %v830 = vpop.f32.mrb[0].mxu0
      %831 = vmatprep.mubr.f32.mxu0 0.0
      %832 = vmatmul.mubr.f32.gmra.mrb[0].mxu0 %v698
      %v833 = vpop.f32.mrb[0].mxu0
      %v834 = vadd.f32 0.0, %v833
      %v835 = vpop.f32.mrb[0].mxu0
      %836 = vmatprep.mubr.f32.mxu0 0.0
      %837 = vmatmul.mubr.f32.gmra.mrb[0].mxu0 %v699
      %v838 = vpop.f32.mrb[0].mxu0
      %v839 = vadd.f32 0.0, %v838
      %v840 = vpop.f32.mrb[0].mxu0
      %841 = vmatprep.mubr.f32.mxu0 0.0
      %842 = vmatmul.mubr.f32.gmra.mrb[0].mxu0 %v700
      %v843 = vpop.f32.mrb[0].mxu0
      %v844 = vadd.f32 0.0, %v843
      %v845 = vpop.f32.mrb[0].mxu0
      %846 = vmatprep.mubr.f32.mxu0 0.0
      %847 = vmatmul.mubr.f32.gmra.mrb[0].mxu0 %v701
      %v848 = vpop.f32.mrb[0].mxu0
      %v849 = vadd.f32 0.0, %v848
      %v850 = vpop.f32.mrb[0].mxu0
      %851 = vmatprep.mubr.f32.mxu0 0.0
      %852 = vmatmul.mubr.f32.gmra.mrb[0].mxu0 %v702
      %v853 = vpop.f32.mrb[0].mxu0
      %v854 = vadd.f32 0.0, %v853
      %v855 = vpop.f32.mrb[0].mxu0
      %856 = vmatprep.mubr.f32.mxu0 0.0
      %857 = vmatmul.mubr.f32.gmra.mrb[0].mxu0 %v703
      %v858 = vpop.f32.mrb[0].mxu0
      %v859 = vadd.f32 0.0, %v858
      %v860 = vpop.f32.mrb[0].mxu0
      %861 = vmatprep.mubr.f32.mxu0 0.0
      %862 = vmatmul.mubr.f32.gmra.mrb[0].mxu0 %v704
      %v863 = vpop.f32.mrb[0].mxu0
      %v864 = vadd.f32 0.0, %v863
      %v865 = vpop.f32.mrb[0].mxu0
      %866 = vmatprep.mubr.f32.mxu0 0.0
      %867 = vmatmul.mubr.f32.gmra.mrb[0].mxu0 %v705
      %v868 = vpop.f32.mrb[0].mxu0
      %v869 = vadd.f32 0.0, %v868
      %v870 = vpop.f32.mrb[0].mxu0
      %871 = vmatprep.mubr.f32.mxu0 0.0
      %872 = vmatmul.mubr.f32.gmra.mrb[0].mxu0 %v706
      %v873 = vpop.f32.mrb[0].mxu0
      %v874 = vadd.f32 0.0, %v873
      %v875 = vpop.f32.mrb[0].mxu0
      %876 = vmatprep.mubr.f32.mxu0 0.0
      %877 = vmatmul.mubr.f32.gmra.mrb[0].mxu0 %v707
      %v878 = vpop.f32.mrb[0].mxu0
      %v879 = vadd.f32 0.0, %v878
      %v880 = vpop.f32.mrb[0].mxu0
      %881 = vmatprep.mubr.f32.mxu0 0.0
      %882 = vmatmul.mubr.f32.gmra.mrb[0].mxu0 %v708
      %v883 = vpop.f32.mrb[0].mxu0
      %v884 = vadd.f32 0.0, %v883
      %v885 = vpop.f32.mrb[0].mxu0
      %886 = vmatprep.mubr.f32.mxu0 0.0
      %887 = vmatmul.mubr.f32.gmra.mrb[0].mxu0 %v709
      %v888 = vpop.f32.mrb[0].mxu0
      %v889 = vadd.f32 0.0, %v888
      %v890 = vpop.f32.mrb[0].mxu0
      %891 = vmatprep.mubr.f32.mxu0 0.0
      %892 = vmatmul.mubr.f32.gmra.mrb[0].mxu0 %v710
      %v893 = vpop.f32.mrb[0].mxu0
      %v894 = vadd.f32 0.0, %v893
      %v895 = vpop.f32.mrb[0].mxu0
      %896 = vmatprep.mubr.f32.mxu0 0.0
      %897 = vmatmul.mubr.f32.gmra.mrb[0].mxu0 %v711
      %v898 = vpop.f32.mrb[0].mxu0
      %v899 = vadd.f32 0.0, %v898
      %v900 = vpop.f32.mrb[0].mxu0
      %901 = vmatprep.mubr.f32.mxu0 0.0
      %902 = vmatmul.mubr.f32.gmra.mrb[0].mxu0 %v712
      %v903 = vpop.f32.mrb[0].mxu0
      %v904 = vadd.f32 0.0, %v903
      %v905 = vpop.f32.mrb[0].mxu0
      %906 = vmatprep.mubr.f32.mxu0 0.0
      %907 = vmatmul.mubr.f32.gmra.mrb[0].mxu0 %v713
      %v908 = vpop.f32.mrb[0].mxu0
      %v909 = vadd.f32 0.0, %v908
      %v910 = vpop.f32.mrb[0].mxu0
      %911 = vmatprep.mubr.f32.mxu0 0.0
      %912 = vmatmul.mubr.f32.gmra.mrb[0].mxu0 %v714
      %v913 = vpop.f32.mrb[0].mxu0
      %v914 = vadd.f32 0.0, %v913
      %v915 = vpop.f32.mrb[0].mxu0
      %916 = vmatprep.mubr.f32.mxu0 0.0
      %917 = vmatmul.mubr.f32.gmra.mrb[0].mxu0 %v715
      %v918 = vpop.f32.mrb[0].mxu0
      %v919 = vadd.f32 0.0, %v918
      %v920 = vpop.f32.mrb[0].mxu0
      %921 = vmatprep.mubr.f32.mxu0 0.0
      %922 = vmatmul.mubr.f32.gmra.mrb[0].mxu0 %v716
      %v923 = vpop.f32.mrb[0].mxu0
      %v924 = vadd.f32 0.0, %v923
      %v925 = vpop.f32.mrb[0].mxu0
      %926 = vmatprep.mubr.f32.mxu0 0.0
      %927 = vmatmul.mubr.f32.gmra.mrb[0].mxu0 %v717
      %v928 = vpop.f32.mrb[0].mxu0
      %v929 = vadd.f32 0.0, %v928
      %v930 = vpop.f32.mrb[0].mxu0
      %931 = vmatprep.mubr.f32.mxu0 0.0
      %932 = vmatmul.mubr.f32.gmra.mrb[0].mxu0 %v718
      %v933 = vpop.f32.mrb[0].mxu0
      %v934 = vadd.f32 0.0, %v933
      %v935 = vpop.f32.mrb[0].mxu0
      %936 = vmatprep.mubr.f32.mxu0 0.0
      %937 = vmatmul.mubr.f32.gmra.mrb[0].mxu0 %v719
      %v938 = vpop.f32.mrb[0].mxu0
      %v939 = vadd.f32 0.0, %v938
      %v940 = vpop.f32.mrb[0].mxu0
      %941 = vmatprep.mubr.f32.mxu0 0.0
      %942 = vmatmul.mubr.f32.gmra.mrb[0].mxu0 %v720
      %v943 = vpop.f32.mrb[0].mxu0
      %v944 = vadd.f32 0.0, %v943
      %v945 = vpop.f32.mrb[0].mxu0
      %946 = vmatprep.mubr.f32.mxu0 0.0
      %947 = vmatmul.mubr.f32.gmra.mrb[0].mxu0 %v721
      %v948 = vpop.f32.mrb[0].mxu0
      %v949 = vadd.f32 0.0, %v948
      %v950 = vpop.f32.mrb[0].mxu0
      %951 = vmatprep.mubr.f32.mxu0 0.0
      %952 = vmatmul.mubr.f32.gmra.mrb[0].mxu0 %v722
      %v953 = vpop.f32.mrb[0].mxu0
      %v954 = vadd.f32 0.0, %v953
      %v955 = vpop.f32.mrb[0].mxu0
      %956 = vmatprep.mubr.f32.mxu0 0.0
      %957 = vmatmul.mubr.f32.gmra.mrb[0].mxu0 %v723
      %v958 = vpop.f32.mrb[0].mxu0
      %v959 = vadd.f32 0.0, %v958
      %v960 = vpop.f32.mrb[0].mxu0
      %961 = vmatprep.mubr.f32.mxu0 0.0
      %962 = vmatmul.mubr.f32.gmra.mrb[0].mxu0 %v724
      %v963 = vpop.f32.mrb[0].mxu0
      %v964 = vadd.f32 0.0, %v963
      %v965 = vpop.f32.mrb[0].mxu0
      %966 = vdwg.mxu0
      %967 = vmatprep.subr.mxu0 0.0
      %968 = vmatpush1.msra.mxu0 %v809
      %969 = vmatprep.subr.mxu0 0.0
      %970 = vmatpush1.msra.mxu0 %v814
      %971 = vmatprep.subr.mxu0 0.0
      %972 = vmatpush1.msra.mxu0 %v819
      %973 = vmatprep.subr.mxu0 0.0
      %974 = vmatpush1.msra.mxu0 %v824
      %975 = vmatprep.subr.mxu0 0.0
      %976 = vmatpush1.msra.mxu0 %v829
      %977 = vmatprep.subr.mxu0 0.0
      %978 = vmatpush1.msra.mxu0 %v834
      %979 = vmatprep.subr.mxu0 0.0
      %980 = vmatpush1.msra.mxu0 %v839
      %981 = vmatprep.subr.mxu0 0.0
      %982 = vmatpush1.msra.mxu0 %v844
      %983 = vmatprep.subr.mxu0 0.0
      %984 = vmatpush1.msra.mxu0 %v849
      %985 = vmatprep.subr.mxu0 0.0
      %986 = vmatpush1.msra.mxu0 %v854
      %987 = vmatprep.subr.mxu0 0.0
      %988 = vmatpush1.msra.mxu0 %v859
      %989 = vmatprep.subr.mxu0 0.0
      %990 = vmatpush1.msra.mxu0 %v864
      %991 = vmatprep.subr.mxu0 0.0
      %992 = vmatpush1.msra.mxu0 %v869
      %993 = vmatprep.subr.mxu0 0.0
      %994 = vmatpush1.msra.mxu0 %v874
      %995 = vmatprep.subr.mxu0 0.0
      %996 = vmatpush1.msra.mxu0 %v879
      %997 = vmatprep.subr.mxu0 0.0
      %998 = vmatpush1.msra.mxu0 %v884
      %999 = vmatprep.subr.mxu0 0.0
      %1000 = vmatpush1.msra.mxu0 0.0
      %1001 = vmatprep.subr.mxu0 0.0
      %1002 = vmatpush1.msra.mxu0 0.0
      %1003 = vmatprep.subr.mxu0 0.0
      %1004 = vmatpush1.msra.mxu0 0.0
      %1005 = vmatprep.subr.mxu0 0.0
      %1006 = vmatpush1.msra.mxu0 0.0
      %1007 = vmatprep.subr.mxu0 0.0
      %1008 = vmatpush1.msra.mxu0 0.0
      %1009 = vmatprep.subr.mxu0 0.0
      %1010 = vmatpush1.msra.mxu0 0.0
      %1011 = vmatprep.subr.mxu0 0.0
      %1012 = vmatpush1.msra.mxu0 0.0
      %1013 = vmatprep.subr.mxu0 0.0
      %1014 = vmatpush1.msra.mxu0 0.0
      %1015 = vmatprep.subr.mxu0 0.0
      %1016 = vmatpush1.msra.mxu0 0.0
      %1017 = vmatprep.subr.mxu0 0.0
      %1018 = vmatpush1.msra.mxu0 0.0
      %1019 = vmatprep.subr.mxu0 0.0
      %1020 = vmatpush1.msra.mxu0 0.0
      %1021 = vmatprep.subr.mxu0 0.0
      %1022 = vmatpush1.msra.mxu0 0.0
      %1023 = vmatprep.subr.mxu0 0.0
      %1024 = vmatpush1.msra.mxu0 0.0
      %1025 = vmatprep.subr.mxu0 0.0
      %1026 = vmatpush1.msra.mxu0 0.0
      %1027 = vmatprep.subr.mxu0 0.0
      %1028 = vmatpush1.msra.mxu0 0.0
      %1029 = vmatprep.subr.mxu0 0.0
      %1030 = vmatpush1.msra.mxu0 0.0
      %1031 = vmatprep.mubr.f32.mxu0 0.0
      %1032 = vmatmul.mubr.f32.gmra.mrb[0].mxu0 %v179
      %v1033 = vpop.f32.mrb[0].mxu0
      %v1034 = vadd.f32 0.0, %v1033
      %v1035 = vpop.f32.mrb[0].mxu0
      %1036 = vmatprep.mubr.f32.mxu0 0.0
      %1037 = vmatmul.mubr.f32.gmra.mrb[0].mxu0 %v180
      %v1038 = vpop.f32.mrb[0].mxu0
      %v1039 = vadd.f32 0.0, %v1038
      %v1040 = vpop.f32.mrb[0].mxu0
      %1041 = vmatprep.mubr.f32.mxu0 0.0
      %1042 = vmatmul.mubr.f32.gmra.mrb[0].mxu0 %v181
      %v1043 = vpop.f32.mrb[0].mxu0
      %v1044 = vadd.f32 0.0, %v1043
      %v1045 = vpop.f32.mrb[0].mxu0
      %1046 = vmatprep.mubr.f32.mxu0 0.0
      %1047 = vmatmul.mubr.f32.gmra.mrb[0].mxu0 %v182
      %v1048 = vpop.f32.mrb[0].mxu0
      %v1049 = vadd.f32 0.0, %v1048
      %v1050 = vpop.f32.mrb[0].mxu0
      %1051 = vmatprep.mubr.f32.mxu0 0.0
      %1052 = vmatmul.mubr.f32.gmra.mrb[0].mxu0 %v183
      %v1053 = vpop.f32.mrb[0].mxu0
      %v1054 = vadd.f32 0.0, %v1053
      %v1055 = vpop.f32.mrb[0].mxu0
      %1056 = vmatprep.mubr.f32.mxu0 0.0
      %1057 = vmatmul.mubr.f32.gmra.mrb[0].mxu0 %v184
      %v1058 = vpop.f32.mrb[0].mxu0
      %v1059 = vadd.f32 0.0, %v1058
      %v1060 = vpop.f32.mrb[0].mxu0
      %1061 = vmatprep.mubr.f32.mxu0 0.0
      %1062 = vmatmul.mubr.f32.gmra.mrb[0].mxu0 %v185
      %v1063 = vpop.f32.mrb[0].mxu0
      %v1064 = vadd.f32 0.0, %v1063
      %v1065 = vpop.f32.mrb[0].mxu0
      %1066 = vmatprep.mubr.f32.mxu0 0.0
      %1067 = vmatmul.mubr.f32.gmra.mrb[0].mxu0 %v186
      %v1068 = vpop.f32.mrb[0].mxu0
      %v1069 = vadd.f32 0.0, %v1068
      %v1070 = vpop.f32.mrb[0].mxu0
      %1071 = vmatprep.mubr.f32.mxu0 0.0
      %1072 = vmatmul.mubr.f32.gmra.mrb[0].mxu0 %v187
      %v1073 = vpop.f32.mrb[0].mxu0
      %v1074 = vadd.f32 0.0, %v1073
      %v1075 = vpop.f32.mrb[0].mxu0
      %1076 = vmatprep.mubr.f32.mxu0 0.0
      %1077 = vmatmul.mubr.f32.gmra.mrb[0].mxu0 %v188
      %v1078 = vpop.f32.mrb[0].mxu0
      %v1079 = vadd.f32 0.0, %v1078
      %v1080 = vpop.f32.mrb[0].mxu0
      %1081 = vmatprep.mubr.f32.mxu0 0.0
      %1082 = vmatmul.mubr.f32.gmra.mrb[0].mxu0 %v189
      %v1083 = vpop.f32.mrb[0].mxu0
      %v1084 = vadd.f32 0.0, %v1083
      %v1085 = vpop.f32.mrb[0].mxu0
      %1086 = vmatprep.mubr.f32.mxu0 0.0
      %1087 = vmatmul.mubr.f32.gmra.mrb[0].mxu0 %v190
      %v1088 = vpop.f32.mrb[0].mxu0
      %v1089 = vadd.f32 0.0, %v1088
      %v1090 = vpop.f32.mrb[0].mxu0
      %1091 = vmatprep.mubr.f32.mxu0 0.0
      %1092 = vmatmul.mubr.f32.gmra.mrb[0].mxu0 %v191
      %v1093 = vpop.f32.mrb[0].mxu0
      %v1094 = vadd.f32 0.0, %v1093
      %v1095 = vpop.f32.mrb[0].mxu0
      %1096 = vmatprep.mubr.f32.mxu0 0.0
      %1097 = vmatmul.mubr.f32.gmra.mrb[0].mxu0 %v192
      %v1098 = vpop.f32.mrb[0].mxu0
      %v1099 = vadd.f32 0.0, %v1098
      %v1100 = vpop.f32.mrb[0].mxu0
      %1101 = vmatprep.mubr.f32.mxu0 0.0
      %1102 = vmatmul.mubr.f32.gmra.mrb[0].mxu0 %v193
      %v1103 = vpop.f32.mrb[0].mxu0
      %v1104 = vadd.f32 0.0, %v1103
      %v1105 = vpop.f32.mrb[0].mxu0
      %1106 = vmatprep.mubr.f32.mxu0 0.0
      %1107 = vmatmul.mubr.f32.gmra.mrb[0].mxu0 %v194
      %v1108 = vpop.f32.mrb[0].mxu0
      %v1109 = vadd.f32 0.0, %v1108
      %v1110 = vpop.f32.mrb[0].mxu0
      %1111 = vdwg.mxu0
      %1112 = vmatprep.subr.mxu0 0.0
      %1113 = vmatpush1.msra.mxu0 %v889
      %1114 = vmatprep.subr.mxu0 0.0
      %1115 = vmatpush1.msra.mxu0 %v894
      %1116 = vmatprep.subr.mxu0 0.0
      %1117 = vmatpush1.msra.mxu0 %v899
      %1118 = vmatprep.subr.mxu0 0.0
      %1119 = vmatpush1.msra.mxu0 %v904
      %1120 = vmatprep.subr.mxu0 0.0
      %1121 = vmatpush1.msra.mxu0 %v909
      %1122 = vmatprep.subr.mxu0 0.0
      %1123 = vmatpush1.msra.mxu0 %v914
      %1124 = vmatprep.subr.mxu0 0.0
      %1125 = vmatpush1.msra.mxu0 %v919
      %1126 = vmatprep.subr.mxu0 0.0
      %1127 = vmatpush1.msra.mxu0 %v924
      %1128 = vmatprep.subr.mxu0 0.0
      %1129 = vmatpush1.msra.mxu0 %v929
      %1130 = vmatprep.subr.mxu0 0.0
      %1131 = vmatpush1.msra.mxu0 %v934
      %1132 = vmatprep.subr.mxu0 0.0
      %1133 = vmatpush1.msra.mxu0 %v939
      %1134 = vmatprep.subr.mxu0 0.0
      %1135 = vmatpush1.msra.mxu0 %v944
      %1136 = vmatprep.subr.mxu0 0.0
      %1137 = vmatpush1.msra.mxu0 %v949
      %1138 = vmatprep.subr.mxu0 0.0
      %1139 = vmatpush1.msra.mxu0 %v954
      %1140 = vmatprep.subr.mxu0 0.0
      %1141 = vmatpush1.msra.mxu0 %v959
      %1142 = vmatprep.subr.mxu0 0.0
      %1143 = vmatpush1.msra.mxu0 %v964
      %1144 = vmatprep.subr.mxu0 0.0
      %1145 = vmatpush1.msra.mxu0 0.0
      %1146 = vmatprep.subr.mxu0 0.0
      %1147 = vmatpush1.msra.mxu0 0.0
      %1148 = vmatprep.subr.mxu0 0.0
      %1149 = vmatpush1.msra.mxu0 0.0
      %1150 = vmatprep.subr.mxu0 0.0
      %1151 = vmatpush1.msra.mxu0 0.0
      %1152 = vmatprep.subr.mxu0 0.0
      %1153 = vmatpush1.msra.mxu0 0.0
      %1154 = vmatprep.subr.mxu0 0.0
      %1155 = vmatpush1.msra.mxu0 0.0
      %1156 = vmatprep.subr.mxu0 0.0
      %1157 = vmatpush1.msra.mxu0 0.0
      %1158 = vmatprep.subr.mxu0 0.0
      %1159 = vmatpush1.msra.mxu0 0.0
      %1160 = vmatprep.subr.mxu0 0.0
      %1161 = vmatpush1.msra.mxu0 0.0
      %1162 = vmatprep.subr.mxu0 0.0
      %1163 = vmatpush1.msra.mxu0 0.0
      %1164 = vmatprep.subr.mxu0 0.0
      %1165 = vmatpush1.msra.mxu0 0.0
      %1166 = vmatprep.subr.mxu0 0.0
      %1167 = vmatpush1.msra.mxu0 0.0
      %1168 = vmatprep.subr.mxu0 0.0
      %1169 = vmatpush1.msra.mxu0 0.0
      %1170 = vmatprep.subr.mxu0 0.0
      %1171 = vmatpush1.msra.mxu0 0.0
      %1172 = vmatprep.subr.mxu0 0.0
      %1173 = vmatpush1.msra.mxu0 0.0
      %1174 = vmatprep.subr.mxu0 0.0
      %1175 = vmatpush1.msra.mxu0 0.0
      %1176 = vmatprep.mubr.f32.mxu0 0.0
      %1177 = vmatmul.mubr.f32.gmra.mrb[0].mxu0 %v195
      %v1178 = vpop.f32.mrb[0].mxu0
      %v1179 = vadd.f32 0.0, %v1178
      %v1180 = vpop.f32.mrb[0].mxu0
      %1181 = vmatprep.mubr.f32.mxu0 0.0
      %1182 = vmatmul.mubr.f32.gmra.mrb[0].mxu0 %v196
      %v1183 = vpop.f32.mrb[0].mxu0
      %v1184 = vadd.f32 0.0, %v1183
      %v1185 = vpop.f32.mrb[0].mxu0
      %1186 = vmatprep.mubr.f32.mxu0 0.0
      %1187 = vmatmul.mubr.f32.gmra.mrb[0].mxu0 %v197
      %v1188 = vpop.f32.mrb[0].mxu0
      %v1189 = vadd.f32 0.0, %v1188
      %v1190 = vpop.f32.mrb[0].mxu0
      %1191 = vmatprep.mubr.f32.mxu0 0.0
      %1192 = vmatmul.mubr.f32.gmra.mrb[0].mxu0 %v198
      %v1193 = vpop.f32.mrb[0].mxu0
      %v1194 = vadd.f32 0.0, %v1193
      %v1195 = vpop.f32.mrb[0].mxu0
      %1196 = vmatprep.mubr.f32.mxu0 0.0
      %1197 = vmatmul.mubr.f32.gmra.mrb[0].mxu0 %v199
      %v1198 = vpop.f32.mrb[0].mxu0
      %v1199 = vadd.f32 0.0, %v1198
      %v1200 = vpop.f32.mrb[0].mxu0
      %1201 = vmatprep.mubr.f32.mxu0 0.0
      %1202 = vmatmul.mubr.f32.gmra.mrb[0].mxu0 %v200
      %v1203 = vpop.f32.mrb[0].mxu0
      %v1204 = vadd.f32 0.0, %v1203
      %v1205 = vpop.f32.mrb[0].mxu0
      %1206 = vmatprep.mubr.f32.mxu0 0.0
      %1207 = vmatmul.mubr.f32.gmra.mrb[0].mxu0 %v201
      %v1208 = vpop.f32.mrb[0].mxu0
      %v1209 = vadd.f32 0.0, %v1208
      %v1210 = vpop.f32.mrb[0].mxu0
      %1211 = vmatprep.mubr.f32.mxu0 0.0
      %1212 = vmatmul.mubr.f32.gmra.mrb[0].mxu0 %v202
      %v1213 = vpop.f32.mrb[0].mxu0
      %v1214 = vadd.f32 0.0, %v1213
      %v1215 = vpop.f32.mrb[0].mxu0
      %1216 = vmatprep.mubr.f32.mxu0 0.0
      %1217 = vmatmul.mubr.f32.gmra.mrb[0].mxu0 %v203
      %v1218 = vpop.f32.mrb[0].mxu0
      %v1219 = vadd.f32 0.0, %v1218
      %v1220 = vpop.f32.mrb[0].mxu0
      %1221 = vmatprep.mubr.f32.mxu0 0.0
      %1222 = vmatmul.mubr.f32.gmra.mrb[0].mxu0 %v204
      %v1223 = vpop.f32.mrb[0].mxu0
      %v1224 = vadd.f32 0.0, %v1223
      %v1225 = vpop.f32.mrb[0].mxu0
      %1226 = vmatprep.mubr.f32.mxu0 0.0
      %1227 = vmatmul.mubr.f32.gmra.mrb[0].mxu0 %v205
      %v1228 = vpop.f32.mrb[0].mxu0
      %v1229 = vadd.f32 0.0, %v1228
      %v1230 = vpop.f32.mrb[0].mxu0
      %1231 = vmatprep.mubr.f32.mxu0 0.0
      %1232 = vmatmul.mubr.f32.gmra.mrb[0].mxu0 %v206
      %v1233 = vpop.f32.mrb[0].mxu0
      %v1234 = vadd.f32 0.0, %v1233
      %v1235 = vpop.f32.mrb[0].mxu0
      %1236 = vmatprep.mubr.f32.mxu0 0.0
      %1237 = vmatmul.mubr.f32.gmra.mrb[0].mxu0 %v207
      %v1238 = vpop.f32.mrb[0].mxu0
      %v1239 = vadd.f32 0.0, %v1238
      %v1240 = vpop.f32.mrb[0].mxu0
      %1241 = vmatprep.mubr.f32.mxu0 0.0
      %1242 = vmatmul.mubr.f32.gmra.mrb[0].mxu0 %v208
      %v1243 = vpop.f32.mrb[0].mxu0
      %v1244 = vadd.f32 0.0, %v1243
      %v1245 = vpop.f32.mrb[0].mxu0
      %1246 = vmatprep.mubr.f32.mxu0 0.0
      %1247 = vmatmul.mubr.f32.gmra.mrb[0].mxu0 %v209
      %v1248 = vpop.f32.mrb[0].mxu0
      %v1249 = vadd.f32 0.0, %v1248
      %v1250 = vpop.f32.mrb[0].mxu0
      %1251 = vmatprep.mubr.f32.mxu0 0.0
      %1252 = vmatmul.mubr.f32.gmra.mrb[0].mxu0 %v210
      %v1253 = vpop.f32.mrb[0].mxu0
      %v1254 = vadd.f32 0.0, %v1253
      %v1255 = vpop.f32.mrb[0].mxu0
      %1256 = vdwg.mxu0
      %v1257 = vmul.f32 %v1034, %v257
      %v1258 = vmul.f32 %v1039, %v257
      %v1259 = vmul.f32 %v1044, %v257
      %v1260 = vmul.f32 %v1049, %v257
      %v1261 = vmul.f32 %v1054, %v257
      %v1262 = vmul.f32 %v1059, %v257
      %v1263 = vmul.f32 %v1064, %v257
      %v1264 = vmul.f32 %v1069, %v257
      %v1265 = vmul.f32 %v1074, %v257
      %v1266 = vmul.f32 %v1079, %v257
      %v1267 = vmul.f32 %v1084, %v257
      %v1268 = vmul.f32 %v1089, %v257
      %v1269 = vmul.f32 %v1094, %v257
      %v1270 = vmul.f32 %v1099, %v257
      %v1271 = vmul.f32 %v1104, %v257
      %v1272 = vmul.f32 %v1109, %v257
      %v1273 = vmul.f32 %v1179, %v258
      %v1274 = vmul.f32 %v1184, %v258
      %v1275 = vmul.f32 %v1189, %v258
      %v1276 = vmul.f32 %v1194, %v258
      %v1277 = vmul.f32 %v1199, %v258
      %v1278 = vmul.f32 %v1204, %v258
      %v1279 = vmul.f32 %v1209, %v258
      %v1280 = vmul.f32 %v1214, %v258
      %v1281 = vmul.f32 %v1219, %v258
      %v1282 = vmul.f32 %v1224, %v258
      %v1283 = vmul.f32 %v1229, %v258
      %v1284 = vmul.f32 %v1234, %v258
      %v1285 = vmul.f32 %v1239, %v258
      %v1286 = vmul.f32 %v1244, %v258
      %v1287 = vmul.f32 %v1249, %v258
      %v1288 = vmul.f32 %v1254, %v258
      %v1289 = vmax.f32 %v1257, 0.0
      %v1290 = vmax.f32 %v1258, 0.0
      %v1291 = vmax.f32 %v1259, 0.0
      %v1292 = vmax.f32 %v1260, 0.0
      %v1293 = vmax.f32 %v1261, 0.0
      %v1294 = vmax.f32 %v1262, 0.0
      %v1295 = vmax.f32 %v1263, 0.0
      %v1296 = vmax.f32 %v1264, 0.0
      %v1297 = vmax.f32 %v1265, 0.0
      %v1298 = vmax.f32 %v1266, 0.0
      %v1299 = vmax.f32 %v1267, 0.0
      %v1300 = vmax.f32 %v1268, 0.0
      %v1301 = vmax.f32 %v1269, 0.0
      %v1302 = vmax.f32 %v1270, 0.0
      %v1303 = vmax.f32 %v1271, 0.0
      %v1304 = vmax.f32 %v1272, 0.0
      %v1305 = vmax.f32 %v1273, 0.0
      %v1306 = vmax.f32 %v1274, 0.0
      %v1307 = vmax.f32 %v1275, 0.0
      %v1308 = vmax.f32 %v1276, 0.0
      %v1309 = vmax.f32 %v1277, 0.0
      %v1310 = vmax.f32 %v1278, 0.0
      %v1311 = vmax.f32 %v1279, 0.0
      %v1312 = vmax.f32 %v1280, 0.0
      %v1313 = vmax.f32 %v1281, 0.0
      %v1314 = vmax.f32 %v1282, 0.0
      %v1315 = vmax.f32 %v1283, 0.0
      %v1316 = vmax.f32 %v1284, 0.0
      %v1317 = vmax.f32 %v1285, 0.0
      %v1318 = vmax.f32 %v1286, 0.0
      %v1319 = vmax.f32 %v1287, 0.0
      %v1320 = vmax.f32 %v1288, 0.0
      %1321 = vst [vmem:[%s177] sm:$0xff] %v1289
      %1322 = vst [vmem:[%s177 + $0x8] sm:$0xff] %v1290
      %1323 = vst [vmem:[%s177 + $0x10] sm:$0xff] %v1291
      %1324 = vst [vmem:[%s177 + $0x18] sm:$0xff] %v1292
      %1325 = vst [vmem:[%s177 + $0x20] sm:$0xff] %v1293
      %1326 = vst [vmem:[%s177 + $0x28] sm:$0xff] %v1294
      %1327 = vst [vmem:[%s177 + $0x30] sm:$0xff] %v1295
      %1328 = vst [vmem:[%s177 + $0x38] sm:$0xff] %v1296
      %1329 = vst [vmem:[%s177 + $0x40] sm:$0xff] %v1297
      %1330 = vst [vmem:[%s177 + $0x48] sm:$0xff] %v1298
      %1331 = vst [vmem:[%s177 + $0x50] sm:$0xff] %v1299
      %1332 = vst [vmem:[%s177 + $0x58] sm:$0xff] %v1300
      %1333 = vst [vmem:[%s177 + $0x60] sm:$0xff] %v1301
      %1334 = vst [vmem:[%s177 + $0x68] sm:$0xff] %v1302
      %1335 = vst [vmem:[%s177 + $0x70] sm:$0xff] %v1303
      %1336 = vst [vmem:[%s177 + $0x78] sm:$0xff] %v1304
      %1337 = vst [vmem:[%s177 + $0x80] sm:$0xff] %v1305
      %1338 = vst [vmem:[%s177 + $0x88] sm:$0xff] %v1306
      %1339 = vst [vmem:[%s177 + $0x90] sm:$0xff] %v1307
      %1340 = vst [vmem:[%s177 + $0x98] sm:$0xff] %v1308
      %1341 = vst [vmem:[%s177 + $0xa0] sm:$0xff] %v1309
      %1342 = vst [vmem:[%s177 + $0xa8] sm:$0xff] %v1310
      %1343 = vst [vmem:[%s177 + $0xb0] sm:$0xff] %v1311
      %1344 = vst [vmem:[%s177 + $0xb8] sm:$0xff] %v1312
      %1345 = vst [vmem:[%s177 + $0xc0] sm:$0xff] %v1313
      %1346 = vst [vmem:[%s177 + $0xc8] sm:$0xff] %v1314
      %1347 = vst [vmem:[%s177 + $0xd0] sm:$0xff] %v1315
      %1348 = vst [vmem:[%s177 + $0xd8] sm:$0xff] %v1316
      %1349 = vst [vmem:[%s177 + $0xe0] sm:$0xff] %v1317
      %1350 = vst [vmem:[%s177 + $0xe8] sm:$0xff] %v1318
      %1351 = vst [vmem:[%s177 + $0xf0] sm:$0xff] %v1319
      %1352 = vst [vmem:[%s177 + $0xf8] sm:$0xff] %v1320
      %s1353 = smul.u32 2, %s14
      %p1354 = scmp.lt.s32.totalorder %s1353, 3
      %s1355 = scalar_select %p1354, %s1353, 3
      %s1356 = smul.addr %s1355, 16
      %s1357 = smul.addr %s1356, 8
      %s1358 = scalar_lea.vmem %s3, %s1357
      // Predicated region
      $region33: #{gcn_module_pallas.1} parent=31 // pred_check
        %p1359 = pneg %p100
      $region34: #{gcn_module_pallas.1} parent=31 // pred_check_branch
        %1361 = sbr.rel (%p1359) target = $region36
      $region35: #{gcn_module_pallas.1} parent=31 // pred_region
        %s1362 = smul.u32 2, %s14
      $region36: #{gcn_module_pallas.1} parent=31 // pred_fallthru
        _
    $region32: #{gcn_module_pallas.1} parent=5 // pred_fallthru
      _
    %p1363 = scmp.le.s32.totalorder 2, %s9
    // Predicated region
    $region37: #{gcn_module_pallas.1} parent=5 // pred_check
      %p1364 = pneg %p1363
    $region38: #{gcn_module_pallas.1} parent=5 // pred_check_branch
      %1366 = sbr.rel (%p1364) target = $region40
    $region39: #{gcn_module_pallas.1} parent=5 // pred_region
      %s1367 = ssub.s32 %s9, 2
      // Predicated region
      $region41: #{gcn_module_pallas.1} parent=39 // pred_check
        %p1368 = pneg %p106
      $region42: #{gcn_module_pallas.1} parent=39 // pred_check_branch
        %1370 = sbr.rel (%p1368) target = $region44
      $region43: #{gcn_module_pallas.1} parent=39 // pred_region
        %s1371 = smul.u32 2, %s15
        %p1372 = scmp.lt.s32.totalorder %s1371, 3
        %s1373 = scalar_select %p1372, %s1371, 3
        %s1374 = smul.addr %s1373, 16
        %s1375 = smul.addr %s1374, 8
        %s1376 = scalar_lea.vmem %s3, %s1375
      $region44: #{gcn_module_pallas.1} parent=39 // pred_fallthru
        _
    $region40: #{gcn_module_pallas.1} parent=5 // pred_fallthru
      _
  $region6: #{gcn_module_pallas.1} parent=0 // loop_footer
    %s13 = sadd.s32 1, %s9
  $region7: #{gcn_module_pallas.1} parent=0 // loop_footer_branch
    %8 = sbr.rel target = $region3
  $region8: #{gcn_module_pallas.1} parent=0 // loop_exit
    _

</llo_original>
